<compile_context>
chip_gen: v7x
topology: tpu7x:2x2x1
jax: 0.10.0
libtpu: 0.0.40
codegen_flags: <defaults>
</compile_context>

<pallas_src>
import functools

import jax
import jax.numpy as jnp
from jax.experimental import pallas as pl
from jax.experimental.pallas import tpu as pltpu


def _round_up(x, m):
    return (x + m - 1) // m * m


def _conv_prelu_kernel(alpha_ref, x_ref, w_ref, b_ref, o_ref,
                       *, TH, W, Wp, Kc, Cout, CH):
    """Fused 3x3 'same' conv + bias + PReLU for one (batch, row-tile) grid step.

    alpha_ref: (1,) f32 in SMEM              - PReLU slope (nn.PReLU() shared param)
    x_ref:     (1, 1, (TH+2)*Wp, Kc) bf16    - row-tile (+ 2 halo rows), kw-stacked chans
    w_ref:     (3, Kc, Cout) bf16            - weights, (kh) x (kw*Cin) x Cout
    b_ref:     (1, Cout) f32                 - bias
    o_ref:     (1, TH, W, Cout) bf16         - conv + PReLU output tile (pre pixel-shuffle)
    """
    alpha = alpha_ref[0]
    bias = b_ref[...]                         # (1, Cout) f32
    w0 = w_ref[0]                             # (Kc, Cout) bf16, loaded once
    w1 = w_ref[1]
    w2 = w_ref[2]

    # Static chunk loop: each chunk's accumulator stays in vregs across the 3 taps.
    for h0 in range(0, TH, CH):
        ch = min(CH, TH - h0)                 # Python ints -> fully static slices
        rows = ch * Wp
        r0 = h0 * Wp
        # Bias-initialized f32 accumulator; chained dot-sum (MRB-friendly on v7x).
        acc = jnp.broadcast_to(bias, (rows, Cout))
        acc = acc + jnp.dot(x_ref[0, 0, r0:r0 + rows, :], w0,
                            preferred_element_type=jnp.float32)
        acc = acc + jnp.dot(x_ref[0, 0, r0 + Wp:r0 + Wp + rows, :], w1,
                            preferred_element_type=jnp.float32)
        acc = acc + jnp.dot(x_ref[0, 0, r0 + 2 * Wp:r0 + 2 * Wp + rows, :], w2,
                            preferred_element_type=jnp.float32)
        acc = jnp.where(acc >= 0, acc, alpha * acc)            # PReLU
        # Wp % 8 == 0 -> aligned sublane regrouping; chunk-sized slice drops the
        # garbage columns (>= W) that only ever see zero padding.
        out = acc.reshape(ch, Wp, Cout)[:, :W, :]
        o_ref[0, h0:h0 + ch, :, :] = out.astype(o_ref.dtype)


def upsample_block_forward(x_nchw, w_oihw, b, alpha, up_scale):
    """UpsampleBLock forward. x:(N,Cin,H,W) f32 -> (N,Cin,H*r,W*r) f32."""
    r = up_scale
    N, Cin, H, W = x_nchw.shape
    Cout = Cin * r * r
    assert w_oihw.shape == (Cout, Cin, 3, 3)
    Kc = 3 * Cin

    Wp = _round_up(W + 2, 8)                  # 8-aligned padded width
    TH = min(H, 64)                           # image rows per grid row-tile
    Ht = _round_up(H, TH)
    num_tiles = Ht // TH
    tin_rows = (TH + 2) * Wp                  # tile rows incl. 2 halo image rows

    # Chunk height: keep the per-chunk f32 accumulator <= ~128 KiB (~32 vregs); prefer
    # a divisor of TH so chunk stores stay tidy.
    CH = max(1, min(TH, (128 * 1024) // (Wp * Cout * 4)))
    while TH % CH:
        CH -= 1

    # NCHW -> NHWC (bf16), pad ONCE: top 1, bottom 2 (+ row-tile padding), left 1,
    # right so the "conv width" Wp is 8-aligned plus 2 extra cols for the kw shifts.
    x = jnp.transpose(x_nchw, (0, 2, 3, 1)).astype(jnp.bfloat16)
    xp = jnp.pad(x, ((0, 0), (1, 2 + Ht - H), (1, Wp + 1 - W), (0, 0)))   # (N,Ht+3,Wp+2,Cin)

    # Partial im2col along kw: channels become (kw, Cin) -> contraction dim K = 3*Cin.
    xcat = jnp.concatenate([xp[:, :, 0:Wp, :], xp[:, :, 1:Wp + 1, :],
                            xp[:, :, 2:Wp + 2, :]], axis=-1)              # (N,Ht+3,Wp,Kc)
    xflat = xcat.reshape(N, (Ht + 3) * Wp, Kc)

    # Per-row-tile windows with their halo (wrapper-side duplication -> plain BlockSpecs).
    tiles = jnp.stack([xflat[:, t * TH * Wp: t * TH * Wp + tin_rows, :]
                       for t in range(num_tiles)], axis=1)                # (N,T,tin_rows,Kc)

    # OIHW -> (kh, kw, Cin, Cout) -> (3, 3*Cin, Cout) bf16; bias stays f32.
    w_k = jnp.transpose(w_oihw, (2, 3, 1, 0)).reshape(3, Kc, Cout).astype(jnp.bfloat16)
    b2 = b.reshape(1, Cout).astype(jnp.float32)
    alpha_arr = jnp.asarray(alpha, jnp.float32).reshape(1)

    kern = functools.partial(_conv_prelu_kernel, TH=TH, W=W, Wp=Wp, Kc=Kc, Cout=Cout, CH=CH)

    flops = 2 * N * Ht * Wp * 9 * Cin * Cout
    bytes_accessed = (N * num_tiles * tin_rows * Kc * 2 + 3 * Kc * Cout * 2 + Cout * 4
                      + N * Ht * W * Cout * 2)

    # Footprint-derived VMEM limit, capped at ~75% of physical VMEM (64 MiB on v7x,
    # 128 MiB on v5e/v6e).
    per_step = tin_rows * Kc * 2 + TH * W * Cout * 2 + 3 * Kc * Cout * 2 + Cout * 4
    vmem_cap = 128 << 20
    try:
        vmem_cap = int(getattr(pltpu.get_tpu_info(), "vmem_capacity_bytes", vmem_cap))
    except Exception:
        pass
    vmem_limit = int(min(max(4 * per_step + (8 << 20), 32 << 20), (vmem_cap * 3) // 4))

    conv = pl.pallas_call(
        kern,
        out_shape=jax.ShapeDtypeStruct((N, Ht, W, Cout), jnp.bfloat16),
        grid_spec=pltpu.PrefetchScalarGridSpec(
            num_scalar_prefetch=0,
            grid=(N, num_tiles),
            in_specs=[
                pl.BlockSpec(memory_space=pltpu.MemorySpace.SMEM),                 # alpha
                pl.BlockSpec((1, 1, tin_rows, Kc), lambda n, t: (n, t, 0, 0)),     # input tile
                pl.BlockSpec((3, Kc, Cout), lambda n, t: (0, 0, 0)),               # weights
                pl.BlockSpec((1, Cout), lambda n, t: (0, 0)),                      # bias
            ],
            out_specs=pl.BlockSpec((1, TH, W, Cout), lambda n, t: (n, t, 0, 0)),
        ),
        compiler_params=pltpu.CompilerParams(
            dimension_semantics=("parallel", "parallel"),
            vmem_limit_bytes=vmem_limit,
        ),
        cost_estimate=pl.CostEstimate(flops=flops, transcendentals=0,
                                      bytes_accessed=bytes_accessed),
    )(alpha_arr, tiles, w_k, b2)

    # PixelShuffle: conv channel c*r*r + i*r + j -> (h*r+i, w*r+j, c). Pure layout,
    # done by XLA on the bf16 kernel output; cast to f32 only at the very end.
    conv = conv[:, :H]                                       # drop row-tile padding
    y = conv.reshape(N, H, W, Cin, r, r)
    y = jnp.transpose(y, (0, 1, 4, 2, 5, 3)).reshape(N, H * r, W * r, Cin)
    # TODO(synk): if the downstream consumer accepts NHWC, drop this final transpose
    # (it is a full HBM read+write of the largest tensor).
    return jnp.transpose(y, (0, 3, 1, 2)).astype(jnp.float32)   # NHWC -> NCHW


def upsample_block_reference(x_nchw, w_oihw, b, alpha, up_scale):
    """Pure-JAX f32 reference matching the PyTorch module."""
    r = up_scale
    y = jax.lax.conv_general_dilated(
        x_nchw, w_oihw, window_strides=(1, 1), padding=((1, 1), (1, 1)),
        dimension_numbers=("NCHW", "OIHW", "NCHW"))
    y = y + b.reshape(1, -1, 1, 1)
    N, C2, H, W = y.shape
    C = C2 // (r * r)
    y = y.reshape(N, C, r, r, H, W)
    y = jnp.transpose(y, (0, 1, 4, 2, 5, 3)).reshape(N, C, H * r, W * r)
    return jnp.where(y >= 0, y, alpha * y)


if __name__ == "__main__":
    key = jax.random.PRNGKey(0)
    kx, kw, kb = jax.random.split(key, 3)

    N, Cin, H, W = 2, 32, 16, 16
    up_scale = 2
    Cout = Cin * up_scale ** 2

    x = jax.random.normal(kx, (N, Cin, H, W), jnp.float32)
    fan_in = Cin * 9
    bound = 1.0 / (fan_in ** 0.5)                 # PyTorch Conv2d default init range
    w = jax.random.uniform(kw, (Cout, Cin, 3, 3), jnp.float32, -bound, bound)
    b = jax.random.uniform(kb, (Cout,), jnp.float32, -bound, bound)
    alpha = jnp.float32(0.25)                     # nn.PReLU() default single parameter

    fwd = jax.jit(functools.partial(upsample_block_forward, up_scale=up_scale))
    y = fwd(x, w, b, alpha)
    jax.block_until_ready(y)

    assert y.shape == (N, Cin, H * up_scale, W * up_scale), y.shape

    y_ref = upsample_block_reference(x, w, b, alpha, up_scale)
    err = float(jnp.max(jnp.abs(y - y_ref)))
    assert err < 5e-2, f"max abs err {err}"       # bf16 operands/output, f32 accumulation

    print("KERNEL_OK")
</pallas_src>

<mosaic_0001>
module attributes {stable_mosaic.version = 11 : i64} {
  func.func @_conv_prelu_kernel(%arg0: i32, %arg1: i32, %arg2: memref<1xf32, #tpu.memory_space<smem>>, %arg3: memref<1x1x432x96xbf16, #tpu.memory_space<vmem>>, %arg4: memref<3x96x128xbf16, #tpu.memory_space<vmem>>, %arg5: memref<1x128xf32, #tpu.memory_space<vmem>>, %arg6: memref<1x16x16x128xbf16, #tpu.memory_space<vmem>>) attributes {dimension_semantics = [#tpu.dimension_semantics<parallel>, #tpu.dimension_semantics<parallel>], iteration_bounds = array<i64: 2, 1>, scalar_prefetch = 0 : i64, scratch_operands = 0 : i64, tpu.core_type = #tpu.core_type<tc>, window_params = [{transform_indices = @transform_0, window_bounds = array<i64: 1>}, {transform_indices = @transform_1, window_bounds = array<i64: 1, 1, 432, 96>}, {pipeline_mode = #tpu.pipeline_mode<synchronous>, transform_indices = @transform_2, window_bounds = array<i64: 3, 96, 128>}, {pipeline_mode = #tpu.pipeline_mode<synchronous>, transform_indices = @transform_3, window_bounds = array<i64: 1, 128>}, {transform_indices = @transform_4, window_bounds = array<i64: 1, 16, 16, 128>}]} {
    %c0 = arith.constant 0 : index
    %0 = memref.load %arg2[%c0] : memref<1xf32, #tpu.memory_space<smem>>
    %c0_0 = arith.constant 0 : index
    %c0_1 = arith.constant 0 : index
    %1 = vector.load %arg5[%c0_0, %c0_1] : memref<1x128xf32, #tpu.memory_space<vmem>>, vector<1x128xf32>
    %c0_2 = arith.constant 0 : index
    %c0_3 = arith.constant 0 : index
    %c0_4 = arith.constant 0 : index
    %2 = vector.load %arg4[%c0_2, %c0_3, %c0_4] : memref<3x96x128xbf16, #tpu.memory_space<vmem>>, vector<1x96x128xbf16>
    %3 = vector.shape_cast %2 : vector<1x96x128xbf16> to vector<96x128xbf16>
    %c1 = arith.constant 1 : index
    %c0_5 = arith.constant 0 : index
    %c0_6 = arith.constant 0 : index
    %4 = vector.load %arg4[%c1, %c0_5, %c0_6] : memref<3x96x128xbf16, #tpu.memory_space<vmem>>, vector<1x96x128xbf16>
    %5 = vector.shape_cast %4 : vector<1x96x128xbf16> to vector<96x128xbf16>
    %c2 = arith.constant 2 : index
    %c0_7 = arith.constant 0 : index
    %c0_8 = arith.constant 0 : index
    %6 = vector.load %arg4[%c2, %c0_7, %c0_8] : memref<3x96x128xbf16, #tpu.memory_space<vmem>>, vector<1x96x128xbf16>
    %7 = vector.shape_cast %6 : vector<1x96x128xbf16> to vector<96x128xbf16>
    %8 = vector.shape_cast %1 : vector<1x128xf32> to vector<1x128xf32>
    %9 = vector.broadcast %8 : vector<1x128xf32> to vector<192x128xf32>
    %c0_9 = arith.constant 0 : index
    %c0_10 = arith.constant 0 : index
    %c0_11 = arith.constant 0 : index
    %c0_12 = arith.constant 0 : index
    %10 = vector.load %arg3[%c0_9, %c0_10, %c0_11, %c0_12] : memref<1x1x432x96xbf16, #tpu.memory_space<vmem>>, vector<1x1x192x96xbf16>
    %11 = vector.shape_cast %10 : vector<1x1x192x96xbf16> to vector<192x96xbf16>
    %cst = arith.constant dense<0.000000e+00> : vector<192x128xf32>
    %12 = tpu.matmul %11, %3, %cst {dimension_numbers = #tpu.dot_dimension_numbers<[1], [0], [0], [1], [0, 0, 1, 1], [], []>} : vector<192x96xbf16>, vector<96x128xbf16>, vector<192x128xf32> -> vector<192x128xf32>
    %13 = arith.addf %9, %12 : vector<192x128xf32>
    %c0_13 = arith.constant 0 : index
    %c0_14 = arith.constant 0 : index
    %c24 = arith.constant 24 : index
    %c0_15 = arith.constant 0 : index
    %14 = vector.load %arg3[%c0_13, %c0_14, %c24, %c0_15] : memref<1x1x432x96xbf16, #tpu.memory_space<vmem>>, vector<1x1x192x96xbf16>
    %15 = vector.shape_cast %14 : vector<1x1x192x96xbf16> to vector<192x96xbf16>
    %cst_16 = arith.constant dense<0.000000e+00> : vector<192x128xf32>
    %16 = tpu.matmul %15, %5, %cst_16 {dimension_numbers = #tpu.dot_dimension_numbers<[1], [0], [0], [1], [0, 0, 1, 1], [], []>} : vector<192x96xbf16>, vector<96x128xbf16>, vector<192x128xf32> -> vector<192x128xf32>
    %17 = arith.addf %13, %16 : vector<192x128xf32>
    %c0_17 = arith.constant 0 : index
    %c0_18 = arith.constant 0 : index
    %c48 = arith.constant 48 : index
    %c0_19 = arith.constant 0 : index
    %18 = vector.load %arg3[%c0_17, %c0_18, %c48, %c0_19] : memref<1x1x432x96xbf16, #tpu.memory_space<vmem>>, vector<1x1x192x96xbf16>
    %19 = vector.shape_cast %18 : vector<1x1x192x96xbf16> to vector<192x96xbf16>
    %cst_20 = arith.constant dense<0.000000e+00> : vector<192x128xf32>
    %20 = tpu.matmul %19, %7, %cst_20 {dimension_numbers = #tpu.dot_dimension_numbers<[1], [0], [0], [1], [0, 0, 1, 1], [], []>} : vector<192x96xbf16>, vector<96x128xbf16>, vector<192x128xf32> -> vector<192x128xf32>
    %21 = arith.addf %17, %20 : vector<192x128xf32>
    %cst_21 = arith.constant 0.000000e+00 : f32
    %22 = vector.broadcast %cst_21 : f32 to vector<192x128xf32>
    %23 = arith.cmpf oge, %21, %22 : vector<192x128xf32>
    %24 = vector.broadcast %0 : f32 to vector<192x128xf32>
    %25 = arith.mulf %24, %21 : vector<192x128xf32>
    %26 = arith.select %23, %21, %25 : vector<192x128xi1>, vector<192x128xf32>
    %27 = vector.shape_cast %26 : vector<192x128xf32> to vector<8x24x128xf32>
    %28 = vector.extract_strided_slice %27 {offsets = [0, 0, 0], sizes = [8, 16, 128], strides = [1, 1, 1]} : vector<8x24x128xf32> to vector<8x16x128xf32>
    %29 = arith.truncf %28 : vector<8x16x128xf32> to vector<8x16x128xbf16>
    %c0_22 = arith.constant 0 : index
    %c0_23 = arith.constant 0 : index
    %c0_24 = arith.constant 0 : index
    %c0_25 = arith.constant 0 : index
    %30 = vector.load %arg6[%c0_22, %c0_23, %c0_24, %c0_25] : memref<1x16x16x128xbf16, #tpu.memory_space<vmem>>, vector<1x8x16x128xbf16>
    %31 = vector.shape_cast %30 : vector<1x8x16x128xbf16> to vector<8x16x128xbf16>
    %32 = vector.shape_cast %29 : vector<8x16x128xbf16> to vector<1x8x16x128xbf16>
    tpu.vector_store %arg6[%c0_22, %c0_23, %c0_24, %c0_25], %32 {strides = array<i32>} : memref<1x16x16x128xbf16, #tpu.memory_space<vmem>>, vector<1x8x16x128xbf16>,
    %33 = vector.shape_cast %1 : vector<1x128xf32> to vector<1x128xf32>
    %34 = vector.broadcast %33 : vector<1x128xf32> to vector<192x128xf32>
    %c0_26 = arith.constant 0 : index
    %c0_27 = arith.constant 0 : index
    %c192 = arith.constant 192 : index
    %c0_28 = arith.constant 0 : index
    %35 = vector.load %arg3[%c0_26, %c0_27, %c192, %c0_28] : memref<1x1x432x96xbf16, #tpu.memory_space<vmem>>, vector<1x1x192x96xbf16>
    %36 = vector.shape_cast %35 : vector<1x1x192x96xbf16> to vector<192x96xbf16>
    %cst_29 = arith.constant dense<0.000000e+00> : vector<192x128xf32>
    %37 = tpu.matmul %36, %3, %cst_29 {dimension_numbers = #tpu.dot_dimension_numbers<[1], [0], [0], [1], [0, 0, 1, 1], [], []>} : vector<192x96xbf16>, vector<96x128xbf16>, vector<192x128xf32> -> vector<192x128xf32>
    %38 = arith.addf %34, %37 : vector<192x128xf32>
    %c0_30 = arith.constant 0 : index
    %c0_31 = arith.constant 0 : index
    %c216 = arith.constant 216 : index
    %c0_32 = arith.constant 0 : index
    %39 = vector.load %arg3[%c0_30, %c0_31, %c216, %c0_32] : memref<1x1x432x96xbf16, #tpu.memory_space<vmem>>, vector<1x1x192x96xbf16>
    %40 = vector.shape_cast %39 : vector<1x1x192x96xbf16> to vector<192x96xbf16>
    %cst_33 = arith.constant dense<0.000000e+00> : vector<192x128xf32>
    %41 = tpu.matmul %40, %5, %cst_33 {dimension_numbers = #tpu.dot_dimension_numbers<[1], [0], [0], [1], [0, 0, 1, 1], [], []>} : vector<192x96xbf16>, vector<96x128xbf16>, vector<192x128xf32> -> vector<192x128xf32>
    %42 = arith.addf %38, %41 : vector<192x128xf32>
    %c0_34 = arith.constant 0 : index
    %c0_35 = arith.constant 0 : index
    %c240 = arith.constant 240 : index
    %c0_36 = arith.constant 0 : index
    %43 = vector.load %arg3[%c0_34, %c0_35, %c240, %c0_36] : memref<1x1x432x96xbf16, #tpu.memory_space<vmem>>, vector<1x1x192x96xbf16>
    %44 = vector.shape_cast %43 : vector<1x1x192x96xbf16> to vector<192x96xbf16>
    %cst_37 = arith.constant dense<0.000000e+00> : vector<192x128xf32>
    %45 = tpu.matmul %44, %7, %cst_37 {dimension_numbers = #tpu.dot_dimension_numbers<[1], [0], [0], [1], [0, 0, 1, 1], [], []>} : vector<192x96xbf16>, vector<96x128xbf16>, vector<192x128xf32> -> vector<192x128xf32>
    %46 = arith.addf %42, %45 : vector<192x128xf32>
    %cst_38 = arith.constant 0.000000e+00 : f32
    %47 = vector.broadcast %cst_38 : f32 to vector<192x128xf32>
    %48 = arith.cmpf oge, %46, %47 : vector<192x128xf32>
    %49 = vector.broadcast %0 : f32 to vector<192x128xf32>
    %50 = arith.mulf %49, %46 : vector<192x128xf32>
    %51 = arith.select %48, %46, %50 : vector<192x128xi1>, vector<192x128xf32>
    %52 = vector.shape_cast %51 : vector<192x128xf32> to vector<8x24x128xf32>
    %53 = vector.extract_strided_slice %52 {offsets = [0, 0, 0], sizes = [8, 16, 128], strides = [1, 1, 1]} : vector<8x24x128xf32> to vector<8x16x128xf32>
    %54 = arith.truncf %53 : vector<8x16x128xf32> to vector<8x16x128xbf16>
    %c0_39 = arith.constant 0 : index
    %c8 = arith.constant 8 : index
    %c0_40 = arith.constant 0 : index
    %c0_41 = arith.constant 0 : index
    %55 = vector.load %arg6[%c0_39, %c8, %c0_40, %c0_41] : memref<1x16x16x128xbf16, #tpu.memory_space<vmem>>, vector<1x8x16x128xbf16>
    %56 = vector.shape_cast %55 : vector<1x8x16x128xbf16> to vector<8x16x128xbf16>
    %57 = vector.shape_cast %54 : vector<8x16x128xbf16> to vector<1x8x16x128xbf16>
    tpu.vector_store %arg6[%c0_39, %c8, %c0_40, %c0_41], %57 {strides = array<i32>} : memref<1x16x16x128xbf16, #tpu.memory_space<vmem>>, vector<1x8x16x128xbf16>,
    return
  }
  func.func @transform_0(%arg0: i32, %arg1: i32) -> i32 {
    %c0_i32 = arith.constant 0 : i32
    %c0_i32_0 = arith.constant 0 : i32
    return %c0_i32 : i32
  }
  func.func @transform_1(%arg0: i32, %arg1: i32) -> (i32, i32, i32, i32) {
    %c0_i32 = arith.constant 0 : i32
    %c0_i32_0 = arith.constant 0 : i32
    %c0_i32_1 = arith.constant 0 : i32
    return %arg0, %arg1, %c0_i32, %c0_i32_0 : i32, i32, i32, i32
  }
  func.func @transform_2(%arg0: i32, %arg1: i32) -> (i32, i32, i32) {
    %c0_i32 = arith.constant 0 : i32
    %c0_i32_0 = arith.constant 0 : i32
    %c0_i32_1 = arith.constant 0 : i32
    %c0_i32_2 = arith.constant 0 : i32
    return %c0_i32, %c0_i32_0, %c0_i32_1 : i32, i32, i32
  }
  func.func @transform_3(%arg0: i32, %arg1: i32) -> (i32, i32) {
    %c0_i32 = arith.constant 0 : i32
    %c0_i32_0 = arith.constant 0 : i32
    %c0_i32_1 = arith.constant 0 : i32
    return %c0_i32, %c0_i32_0 : i32, i32
  }
  func.func @transform_4(%arg0: i32, %arg1: i32) -> (i32, i32, i32, i32) {
    %c0_i32 = arith.constant 0 : i32
    %c0_i32_0 = arith.constant 0 : i32
    %c0_i32_1 = arith.constant 0 : i32
    return %arg0, %arg1, %c0_i32, %c0_i32_0 : i32, i32, i32, i32
  }
}

</mosaic_0001>

<llo_original>
// kernel: upsample_block_forward.1
$region0: #{upsample_block_forward.1}
  #allocation0 [shape = 'u32[]', space=smem, size = 0x4, offset = 0x4, fixed_abs, tag = 'smem constant byte address 0x4 - core index']
  #allocation1 [shape = 'u32[144,128]{1,0:T(1,128)}', space=vmem, size = 0x12000, scoped, tag = 'internal scratch']
  #allocation2 [shape = 'f32[1]{0:T(128)S(6)}', space=smem, size = 0x200, scoped, tag = 'scoped memory for upsample_block_forward.1']
  %s0 = inlined_call_operand.<no memory space> [shape: f32[1], index: 0, kind: input, shape index: {}]
  %s1 = inlined_call_operand.vmem [shape: bf16[2,1,432,96], index: 1, kind: input, shape index: {}]
  %s2 = inlined_call_operand.vmem [shape: bf16[3,96,128], index: 2, kind: input, shape index: {}]
  %s3 = inlined_call_operand.vmem [shape: f32[1,128], index: 3, kind: input, shape index: {}]
  %s4 = inlined_call_operand.vmem [shape: bf16[2,16,16,128], index: 4, kind: output, shape index: {}]
  %s5 = sld [smem:[#allocation0]]
  $region49: #{upsample_block_forward.1} parent=0
    _
  %s7 = ssub.s32 1, %s5
  %s8 = scalar_select 0, %s7, %s5
  %9 = sst [smem:[#allocation2]] %s0
  loop: start=0, step=1, limit=4
  $region2: #{upsample_block_forward.1} parent=0 // loop_pre_header
    _
  $region3: #{upsample_block_forward.1} parent=0 // loop_header
    %s11 = sphi 0, %s15
    %p12 = scmp.ge.s32.totalorder %s11, 4
    %s18 = sphi 0, %s30
    %s19 = sphi 0, %s26
    %s20 = sphi 0, %s18
    %s21 = sphi 0, %s19
    %s22 = sphi 0, %s20
    %s23 = sphi 0, %s21
    %s31 = sphi 0, %s31
    %s33 = sphi 0, %s31
    %s34 = sphi 0, %s33
    %s48 = sphi 0, %s34
    %s56 = sphi 0, %s58
    %s59 = sphi 0, %s56
    %s60 = sphi 0, %s59
    %s76 = sphi 0, %s60
    %s80 = sphi 0, %s80
    %s82 = sphi 0, %s80
    %s83 = sphi 0, %s82
    %s97 = sphi 0, %s83
    %s101 = sphi 0, %s101
    %s103 = sphi 0, %s101
    %s104 = sphi 0, %s103
    %s118 = sphi 0, %s104
    %s126 = sphi 0, %s128
    %s129 = sphi 0, %s126
    %s130 = sphi 0, %s129
    %s146 = sphi 0, %s130
  $region4: #{upsample_block_forward.1} parent=0 // loop_header_branch
    %14 = sbr.rel (%p12) target = $region8
  $region5: #{upsample_block_forward.1} parent=0 // loop_body
    %s16 = ssub.s32 %s11, 1
    %s17 = ssub.s32 %s11, 2
    %s24 = sadd.s32 1, %s19
    %p25 = scmp.ge.s32.totalorder %s24, 1
    %s26 = scalar_select %p25, 0, %s24
    %s27 = sadd.s32 1, %s18
    %s28 = scalar_select %p25, %s27, %s18
    %p29 = scmp.ge.s32.totalorder %s28, 2
    %s30 = scalar_select %p29, 0, %s28
    %s32 = sadd.s32 %s31, 1
    %p35 = scmp.eq.s32.totalorder %s11, 1
    %p36 = scmp.ne.s32.totalorder %s31, %s33
    %p37 = scmp.eq.s32.totalorder %s11, 0
    %p38 = por %p36, %p37
    %p39 = scmp.ne.s32.totalorder %s31, %s33
    %p40 = scmp.eq.s32.totalorder %s16, 1
    %p41 = por %p39, %p40
    %p42 = scmp.ne.s32.totalorder %s33, %s34
    %p43 = scmp.eq.s32.totalorder %s16, 0
    %p44 = por %p42, %p43
    %p45 = scmp.ne.s32.totalorder %s33, %s34
    %p46 = scmp.eq.s32.totalorder %s17, 1
    %p47 = por %p45, %p46
    %p49 = scmp.ne.s32.totalorder %s34, %s48
    %p50 = scmp.eq.s32.totalorder %s17, 0
    %p51 = por %p49, %p50
    %s52 = ssub.s32 %s18, %s30
    %s53 = ssub.s32 %s19, %s26
    %s54 = sor.u32 %s52, %s53
    %p55 = scmp.eq.s32.totalorder %s54, 0
    %s57 = sadd.s32 %s56, 1
    %s58 = scalar_select %p55, %s56, %s57
    %p61 = pneg %p55
    %p62 = scmp.eq.s32.totalorder %s11, 1
    %p63 = por %p61, %p62
    %p64 = scmp.ne.s32.totalorder %s56, %s59
    %p65 = scmp.eq.s32.totalorder %s11, 0
    %p66 = por %p64, %p65
    %p67 = scmp.ne.s32.totalorder %s56, %s59
    %p68 = scmp.eq.s32.totalorder %s16, 1
    %p69 = por %p67, %p68
    %p70 = scmp.ne.s32.totalorder %s59, %s60
    %p71 = scmp.eq.s32.totalorder %s16, 0
    %p72 = por %p70, %p71
    %p73 = scmp.ne.s32.totalorder %s59, %s60
    %p74 = scmp.eq.s32.totalorder %s17, 1
    %p75 = por %p73, %p74
    %p77 = scmp.ne.s32.totalorder %s60, %s76
    %p78 = scmp.eq.s32.totalorder %s17, 0
    %p79 = por %p77, %p78
    %s81 = sadd.s32 %s80, 1
    %p84 = scmp.eq.s32.totalorder %s11, 1
    %p85 = scmp.ne.s32.totalorder %s80, %s82
    %p86 = scmp.eq.s32.totalorder %s11, 0
    %p87 = por %p85, %p86
    %p88 = scmp.ne.s32.totalorder %s80, %s82
    %p89 = scmp.eq.s32.totalorder %s16, 1
    %p90 = por %p88, %p89
    %p91 = scmp.ne.s32.totalorder %s82, %s83
    %p92 = scmp.eq.s32.totalorder %s16, 0
    %p93 = por %p91, %p92
    %p94 = scmp.ne.s32.totalorder %s82, %s83
    %p95 = scmp.eq.s32.totalorder %s17, 1
    %p96 = por %p94, %p95
    %p98 = scmp.ne.s32.totalorder %s83, %s97
    %p99 = scmp.eq.s32.totalorder %s17, 0
    %p100 = por %p98, %p99
    %s102 = sadd.s32 %s101, 1
    %p105 = scmp.eq.s32.totalorder %s11, 1
    %p106 = scmp.ne.s32.totalorder %s101, %s103
    %p107 = scmp.eq.s32.totalorder %s11, 0
    %p108 = por %p106, %p107
    %p109 = scmp.ne.s32.totalorder %s101, %s103
    %p110 = scmp.eq.s32.totalorder %s16, 1
    %p111 = por %p109, %p110
    %p112 = scmp.ne.s32.totalorder %s103, %s104
    %p113 = scmp.eq.s32.totalorder %s16, 0
    %p114 = por %p112, %p113
    %p115 = scmp.ne.s32.totalorder %s103, %s104
    %p116 = scmp.eq.s32.totalorder %s17, 1
    %p117 = por %p115, %p116
    %p119 = scmp.ne.s32.totalorder %s104, %s118
    %p120 = scmp.eq.s32.totalorder %s17, 0
    %p121 = por %p119, %p120
    %s122 = ssub.s32 %s18, %s30
    %s123 = ssub.s32 %s19, %s26
    %s124 = sor.u32 %s122, %s123
    %p125 = scmp.eq.s32.totalorder %s124, 0
    %s127 = sadd.s32 %s126, 1
    %s128 = scalar_select %p125, %s126, %s127
    %p131 = pneg %p125
    %p132 = scmp.eq.s32.totalorder %s11, 1
    %p133 = por %p131, %p132
    %p134 = scmp.ne.s32.totalorder %s126, %s129
    %p135 = scmp.eq.s32.totalorder %s11, 0
    %p136 = por %p134, %p135
    %p137 = scmp.ne.s32.totalorder %s126, %s129
    %p138 = scmp.eq.s32.totalorder %s16, 1
    %p139 = por %p137, %p138
    %p140 = scmp.ne.s32.totalorder %s129, %s130
    %p141 = scmp.eq.s32.totalorder %s16, 0
    %p142 = por %p140, %p141
    %p143 = scmp.ne.s32.totalorder %s129, %s130
    %p144 = scmp.eq.s32.totalorder %s17, 1
    %p145 = por %p143, %p144
    %p147 = scmp.ne.s32.totalorder %s130, %s146
    %p148 = scmp.eq.s32.totalorder %s17, 0
    %p149 = por %p147, %p148
    %p150 = scmp.le.s32.totalorder 1, %s11
    %p151 = scmp.lt.s32.totalorder %s11, 3
    %p152 = pnand %p150, %p151
    %p153 = pneg %p152
    // Predicated region
    $region9: #{upsample_block_forward.1} parent=5 // pred_check
      _
    $region10: #{upsample_block_forward.1} parent=5 // pred_check_branch
      %155 = sbr.rel (%p152) target = $region12
    $region11: #{upsample_block_forward.1} parent=5 // pred_region
      %s156 = ssub.s32 %s11, 1
      // Predicated region
      $region13: #{upsample_block_forward.1} parent=11 // pred_check
        %p157 = pneg %p44
      $region14: #{upsample_block_forward.1} parent=11 // pred_check_branch
        %159 = sbr.rel (%p157) target = $region16
      $region15: #{upsample_block_forward.1} parent=11 // pred_region
        _
      $region16: #{upsample_block_forward.1} parent=11 // pred_fallthru
        _
      // Predicated region
      $region17: #{upsample_block_forward.1} parent=11 // pred_check
        %p160 = pneg %p93
      $region18: #{upsample_block_forward.1} parent=11 // pred_check_branch
        %162 = sbr.rel (%p160) target = $region20
      $region19: #{upsample_block_forward.1} parent=11 // pred_region
        _
      $region20: #{upsample_block_forward.1} parent=11 // pred_fallthru
        _
      // Predicated region
      $region21: #{upsample_block_forward.1} parent=11 // pred_check
        %p163 = pneg %p114
      $region22: #{upsample_block_forward.1} parent=11 // pred_check_branch
        %165 = sbr.rel (%p163) target = $region24
      $region23: #{upsample_block_forward.1} parent=11 // pred_region
        _
      $region24: #{upsample_block_forward.1} parent=11 // pred_fallthru
        _
    $region12: #{upsample_block_forward.1} parent=5 // pred_fallthru
      _
    %p166 = scmp.lt.s32.totalorder %s11, 2
    // Predicated region
    $region25: #{upsample_block_forward.1} parent=5 // pred_check
      %p167 = pneg %p166
    $region26: #{upsample_block_forward.1} parent=5 // pred_check_branch
      %169 = sbr.rel (%p167) target = $region28
    $region27: #{upsample_block_forward.1} parent=5 // pred_region
      // Predicated region
      $region29: #{upsample_block_forward.1} parent=27 // pred_check
        %p170 = pneg %p66
      $region30: #{upsample_block_forward.1} parent=27 // pred_check_branch
        %172 = sbr.rel (%p170) target = $region32
      $region31: #{upsample_block_forward.1} parent=27 // pred_region
        %p173 = scmp.lt.s32.totalorder %s18, 1
        %s174 = scalar_select %p173, %s18, 1
        %p175 = scmp.lt.s32.totalorder %s19, 0
        %s176 = scalar_select %p175, %s19, 0
        %s177 = smul.addr %s176, 54
        %s178 = smul.addr %s174, 54
        %s179 = sadd.s32 %s177, %s178
        %s180 = smul.addr %s179, 4
        %s181 = scalar_lea.vmem %s1, %s180
      $region32: #{upsample_block_forward.1} parent=27 // pred_fallthru
        _
    $region28: #{upsample_block_forward.1} parent=5 // pred_fallthru
      _
    %p182 = scmp.le.s32.totalorder 1, %s11
    %p183 = scmp.lt.s32.totalorder %s11, 3
    %p184 = pnand %p182, %p183
    %p185 = pneg %p184
    // Predicated region
    $region33: #{upsample_block_forward.1} parent=5 // pred_check
      _
    $region34: #{upsample_block_forward.1} parent=5 // pred_check_branch
      %187 = sbr.rel (%p184) target = $region36
    $region35: #{upsample_block_forward.1} parent=5 // pred_region
      %s188 = ssub.s32 %s11, 1
      %p189 = pneg %p44
      %p190 = pneg %p41
      %p191 = scmp.lt.s32.totalorder %s20, 1
      %s192 = scalar_select %p191, %s20, 1
      %p193 = scmp.lt.s32.totalorder %s21, 0
      %s194 = scalar_select %p193, %s21, 0
      %s195 = smul.addr %s194, 54
      %s196 = smul.addr %s192, 54
      %s197 = sadd.s32 %s195, %s196
      %s198 = smul.addr %s197, 4
      %s199 = scalar_lea.vmem %s1, %s198
      %p200 = pneg %p72
      %p201 = pneg %p69
      %p202 = pneg %p93
      %p203 = pneg %p90
      %p204 = pneg %p114
      %p205 = pneg %p111
      %p206 = pneg %p142
      %p207 = pneg %p139
      %s208 = smul.u32 16, %s21
      %p209 = scmp.lt.s32.totalorder %s20, 1
      %s210 = scalar_select %p209, %s20, 1
      %p211 = scmp.lt.s32.totalorder %s208, 15
      %s212 = scalar_select %p211, %s208, 15
      %s213 = smul.addr %s212, 2
      %s214 = smul.addr %s210, 32
      %s215 = sadd.s32 %s213, %s214
      %s216 = smul.addr %s215, 4
      %s217 = scalar_lea.vmem %s4, %s216
      %p218 = scmp.lt.s32.totalorder %s20, 1
      %s219 = scalar_select %p218, %s20, 1
      %p220 = scmp.lt.s32.totalorder %s21, 0
      %s221 = scalar_select %p220, %s21, 0
      %s222 = smul.addr %s221, 54
      %s223 = smul.addr %s219, 54
      %s224 = sadd.s32 %s222, %s223
      %s225 = smul.addr %s224, 4
      %s226 = scalar_lea.vmem %s1, %s225
      %s227 = smul.u32 16, %s21
      %p228 = scmp.lt.s32.totalorder %s20, 1
      %s229 = scalar_select %p228, %s20, 1
      %p230 = scmp.lt.s32.totalorder %s227, 15
      %s231 = scalar_select %p230, %s227, 15
      %s232 = smul.addr %s231, 2
      %s233 = smul.addr %s229, 32
      %s234 = sadd.s32 %s232, %s233
      %s235 = smul.addr %s234, 4
      %s236 = scalar_lea.vmem %s4, %s235
      %s237 = smul.u32 16, %s21
      %s239 = sld [smem:[#allocation2]]
      %v240 = vld [vmem:[%s3] sm:$0x1]
      %v241 = vld [vmem:[%s2] sm:$0xf]
      %v242 = vld [vmem:[%s2 + $0x4] sm:$0xf]
      %v243 = vld [vmem:[%s2 + $0x8] sm:$0xf]
      %v244 = vld [vmem:[%s2 + $0xc] sm:$0xf]
      %v245 = vld [vmem:[%s2 + $0x10] sm:$0xf]
      %v246 = vld [vmem:[%s2 + $0x14] sm:$0xf]
      %v247 = vld [vmem:[%s2 + $0x18] sm:$0xf]
      %v248 = vld [vmem:[%s2 + $0x1c] sm:$0xf]
      %v249 = vld [vmem:[%s2 + $0x20] sm:$0xf]
      %v250 = vld [vmem:[%s2 + $0x24] sm:$0xf]
      %v251 = vld [vmem:[%s2 + $0x28] sm:$0xf]
      %v252 = vld [vmem:[%s2 + $0x2c] sm:$0xf]
      %s253 = scalar_lea.vmem %s2, 48
      %v254 = vld [vmem:[%s253] sm:$0xf]
      %v255 = vld [vmem:[%s253 + $0x4] sm:$0xf]
      %v256 = vld [vmem:[%s253 + $0x8] sm:$0xf]
      %v257 = vld [vmem:[%s253 + $0xc] sm:$0xf]
      %v258 = vld [vmem:[%s253 + $0x10] sm:$0xf]
      %v259 = vld [vmem:[%s253 + $0x14] sm:$0xf]
      %v260 = vld [vmem:[%s253 + $0x18] sm:$0xf]
      %v261 = vld [vmem:[%s253 + $0x1c] sm:$0xf]
      %v262 = vld [vmem:[%s253 + $0x20] sm:$0xf]
      %v263 = vld [vmem:[%s253 + $0x24] sm:$0xf]
      %v264 = vld [vmem:[%s253 + $0x28] sm:$0xf]
      %v265 = vld [vmem:[%s253 + $0x2c] sm:$0xf]
      %s266 = scalar_lea.vmem %s2, 96
      %v267 = vld [vmem:[%s266] sm:$0xf]
      %v268 = vld [vmem:[%s266 + $0x4] sm:$0xf]
      %v269 = vld [vmem:[%s266 + $0x8] sm:$0xf]
      %v270 = vld [vmem:[%s266 + $0xc] sm:$0xf]
      %v271 = vld [vmem:[%s266 + $0x10] sm:$0xf]
      %v272 = vld [vmem:[%s266 + $0x14] sm:$0xf]
      %v273 = vld [vmem:[%s266 + $0x18] sm:$0xf]
      %v274 = vld [vmem:[%s266 + $0x1c] sm:$0xf]
      %v275 = vld [vmem:[%s266 + $0x20] sm:$0xf]
      %v276 = vld [vmem:[%s266 + $0x24] sm:$0xf]
      %v277 = vld [vmem:[%s266 + $0x28] sm:$0xf]
      %v278 = vld [vmem:[%s266 + $0x2c] sm:$0xf]
      %v280 = vlaneseq
      %v281 = vshrl.u32 %v280, 7
      %v282 = vsub.s32 0, %v281
      %v283 = vrot.slane %v240, %v282
      %v285 = vld [vmem:[%s226] sm:$0xf]
      %v286 = vld [vmem:[%s226 + $0x4] sm:$0xf]
      %v287 = vld [vmem:[%s226 + $0x8] sm:$0xf]
      %v288 = vld [vmem:[%s226 + $0xc] sm:$0xf]
      %v289 = vld [vmem:[%s226 + $0x10] sm:$0xf]
      %v290 = vld [vmem:[%s226 + $0x14] sm:$0xf]
      %v291 = vld [vmem:[%s226 + $0x18] sm:$0xf]
      %v292 = vld [vmem:[%s226 + $0x1c] sm:$0xf]
      %v293 = vld [vmem:[%s226 + $0x20] sm:$0xf]
      %v294 = vld [vmem:[%s226 + $0x24] sm:$0xf]
      %v295 = vld [vmem:[%s226 + $0x28] sm:$0xf]
      %v296 = vld [vmem:[%s226 + $0x2c] sm:$0xf]
      %v297 = vld [vmem:[%s226 + $0x30] sm:$0xf]
      %v298 = vld [vmem:[%s226 + $0x34] sm:$0xf]
      %v299 = vld [vmem:[%s226 + $0x38] sm:$0xf]
      %v300 = vld [vmem:[%s226 + $0x3c] sm:$0xf]
      %v301 = vld [vmem:[%s226 + $0x40] sm:$0xf]
      %v302 = vld [vmem:[%s226 + $0x44] sm:$0xf]
      %v303 = vld [vmem:[%s226 + $0x48] sm:$0xf]
      %v304 = vld [vmem:[%s226 + $0x4c] sm:$0xf]
      %v305 = vld [vmem:[%s226 + $0x50] sm:$0xf]
      %v306 = vld [vmem:[%s226 + $0x54] sm:$0xf]
      %v307 = vld [vmem:[%s226 + $0x58] sm:$0xf]
      %v308 = vld [vmem:[%s226 + $0x5c] sm:$0xf]
      %v333 = vunpack.c.l.b16 %v285
      %v334 = vunpack.c.l.b16 %v286
      %v335 = vunpack.c.l.b16 %v287
      %v336 = vunpack.c.l.b16 %v288
      %v337 = vunpack.c.l.b16 %v289
      %v338 = vunpack.c.l.b16 %v290
      %v339 = vunpack.c.l.b16 %v291
      %v340 = vunpack.c.l.b16 %v292
      %v341 = vunpack.c.l.b16 %v293
      %v342 = vunpack.c.l.b16 %v294
      %v343 = vunpack.c.l.b16 %v295
      %v344 = vunpack.c.l.b16 %v296
      %v345 = vunpack.c.l.b16 %v297
      %v346 = vunpack.c.l.b16 %v298
      %v347 = vunpack.c.l.b16 %v299
      %v348 = vunpack.c.l.b16 %v300
      %v349 = vunpack.c.l.b16 %v301
      %v350 = vunpack.c.l.b16 %v302
      %v351 = vunpack.c.l.b16 %v303
      %v352 = vunpack.c.l.b16 %v304
      %v353 = vunpack.c.l.b16 %v305
      %v354 = vunpack.c.l.b16 %v306
      %v355 = vunpack.c.l.b16 %v307
      %v356 = vunpack.c.l.b16 %v308
      %v357 = vpack.c.b16 %v334, %v333
      %v358 = vpack.c.b16 %v336, %v335
      %v359 = vpack.c.b16 %v338, %v337
      %v360 = vpack.c.b16 %v340, %v339
      %v361 = vpack.c.b16 %v342, %v341
      %v362 = vpack.c.b16 %v344, %v343
      %v363 = vpack.c.b16 %v346, %v345
      %v364 = vpack.c.b16 %v348, %v347
      %v365 = vpack.c.b16 %v350, %v349
      %v366 = vpack.c.b16 %v352, %v351
      %v367 = vpack.c.b16 %v354, %v353
      %v368 = vpack.c.b16 %v356, %v355
      %v381 = vunpack.c.l.b16 %v241
      %v382 = vunpack.c.l.b16 %v242
      %v383 = vunpack.c.l.b16 %v243
      %v384 = vunpack.c.l.b16 %v244
      %v385 = vunpack.c.l.b16 %v245
      %v386 = vunpack.c.l.b16 %v246
      %v387 = vunpack.c.l.b16 %v247
      %v388 = vunpack.c.l.b16 %v248
      %v389 = vunpack.c.l.b16 %v249
      %v390 = vunpack.c.l.b16 %v250
      %v391 = vunpack.c.l.b16 %v251
      %v392 = vunpack.c.l.b16 %v252
      %v393 = vpack.c.b16 %v382, %v381
      %v394 = vpack.c.b16 %v384, %v383
      %v395 = vpack.c.b16 %v386, %v385
      %v396 = vpack.c.b16 %v388, %v387
      %v397 = vpack.c.b16 %v390, %v389
      %v398 = vpack.c.b16 %v392, %v391
      %vm405 = vcmask 785408
      %v407 = vsel %vm405, %v357, 0
      %v410 = vsel %vm405, %v358, 0
      %v413 = vsel %vm405, %v359, 0
      %v416 = vsel %vm405, %v360, 0
      %v419 = vsel %vm405, %v361, 0
      %v422 = vsel %vm405, %v362, 0
      %v425 = vsel %vm405, %v363, 0
      %v428 = vsel %vm405, %v364, 0
      %v431 = vsel %vm405, %v365, 0
      %v434 = vsel %vm405, %v366, 0
      %v437 = vsel %vm405, %v367, 0
      %v440 = vsel %vm405, %v368, 0
      %442 = vmatprep.subr.bf16.mxu0 0
      %443 = vmatpush1.bf16.msra.mxu0 %v393
      %444 = vmatprep.subr.bf16.mxu0 0
      %445 = vmatpush1.bf16.msra.mxu0 %v394
      %446 = vmatprep.subr.bf16.mxu0 0
      %447 = vmatpush1.bf16.msra.mxu0 %v395
      %448 = vmatprep.subr.bf16.mxu0 0
      %449 = vmatpush1.bf16.msra.mxu0 %v396
      %450 = vmatprep.subr.bf16.mxu0 0
      %451 = vmatpush1.bf16.msra.mxu0 %v397
      %452 = vmatprep.subr.bf16.mxu0 0
      %453 = vmatpush1.bf16.msra.mxu0 %v398
      %454 = vmatprep.subr.bf16.mxu0 0
      %455 = vmatpush1.bf16.msra.mxu0 0
      %456 = vmatprep.subr.bf16.mxu0 0
      %457 = vmatpush1.bf16.msra.mxu0 0
      %458 = vmatprep.subr.bf16.mxu0 0
      %459 = vmatpush1.bf16.msra.mxu0 0
      %460 = vmatprep.subr.bf16.mxu0 0
      %461 = vmatpush1.bf16.msra.mxu0 0
      %462 = vmatprep.subr.bf16.mxu0 0
      %463 = vmatpush1.bf16.msra.mxu0 0
      %464 = vmatprep.subr.bf16.mxu0 0
      %465 = vmatpush1.bf16.msra.mxu0 0
      %466 = vmatprep.subr.bf16.mxu0 0
      %467 = vmatpush1.bf16.msra.mxu0 0
      %468 = vmatprep.subr.bf16.mxu0 0
      %469 = vmatpush1.bf16.msra.mxu0 0
      %470 = vmatprep.subr.bf16.mxu0 0
      %471 = vmatpush1.bf16.msra.mxu0 0
      %472 = vmatprep.subr.bf16.mxu0 0
      %473 = vmatpush1.bf16.msra.mxu0 0
      %474 = vmatprep.mubr.bf16.mxu0 0
      %475 = vmatmul.mubr.bf16.gmra.mrb[0].mxu0 %v407
      %v476 = vpop.f32.mrb[0].mxu0
      %v477 = vadd.f32 0.0, %v476
      %v478 = vpop.f32.mrb[0].mxu0
      %v479 = vpop.f32.mrb[0].mxu0
      %v480 = vadd.f32 0.0, %v479
      %v481 = vpop.f32.mrb[0].mxu0
      %482 = vmatprep.mubr.bf16.mxu0 0
      %483 = vmatmul.mubr.bf16.gmra.mrb[0].mxu0 %v410
      %v484 = vpop.f32.mrb[0].mxu0
      %v485 = vpop.f32.mrb[0].mxu0
      %v486 = vpop.f32.mrb[0].mxu0
      %v487 = vadd.f32 0.0, %v486
      %v488 = vpop.f32.mrb[0].mxu0
      %489 = vmatprep.mubr.bf16.mxu0 0
      %490 = vmatmul.mubr.bf16.gmra.mrb[0].mxu0 %v413
      %v491 = vpop.f32.mrb[0].mxu0
      %v492 = vadd.f32 0.0, %v491
      %v493 = vpop.f32.mrb[0].mxu0
      %v494 = vpop.f32.mrb[0].mxu0
      %v495 = vpop.f32.mrb[0].mxu0
      %496 = vmatprep.mubr.bf16.mxu0 0
      %497 = vmatmul.mubr.bf16.gmra.mrb[0].mxu0 %v416
      %v498 = vpop.f32.mrb[0].mxu0
      %v499 = vadd.f32 0.0, %v498
      %v500 = vpop.f32.mrb[0].mxu0
      %v501 = vpop.f32.mrb[0].mxu0
      %v502 = vadd.f32 0.0, %v501
      %v503 = vpop.f32.mrb[0].mxu0
      %504 = vmatprep.mubr.bf16.mxu0 0
      %505 = vmatmul.mubr.bf16.gmra.mrb[0].mxu0 %v419
      %v506 = vpop.f32.mrb[0].mxu0
      %v507 = vpop.f32.mrb[0].mxu0
      %v508 = vpop.f32.mrb[0].mxu0
      %v509 = vadd.f32 0.0, %v508
      %v510 = vpop.f32.mrb[0].mxu0
      %511 = vmatprep.mubr.bf16.mxu0 0
      %512 = vmatmul.mubr.bf16.gmra.mrb[0].mxu0 %v422
      %v513 = vpop.f32.mrb[0].mxu0
      %v514 = vadd.f32 0.0, %v513
      %v515 = vpop.f32.mrb[0].mxu0
      %v516 = vpop.f32.mrb[0].mxu0
      %v517 = vpop.f32.mrb[0].mxu0
      %518 = vmatprep.mubr.bf16.mxu0 0
      %519 = vmatmul.mubr.bf16.gmra.mrb[0].mxu0 %v425
      %v520 = vpop.f32.mrb[0].mxu0
      %v521 = vadd.f32 0.0, %v520
      %v522 = vpop.f32.mrb[0].mxu0
      %v523 = vpop.f32.mrb[0].mxu0
      %v524 = vadd.f32 0.0, %v523
      %v525 = vpop.f32.mrb[0].mxu0
      %526 = vmatprep.mubr.bf16.mxu0 0
      %527 = vmatmul.mubr.bf16.gmra.mrb[0].mxu0 %v428
      %v528 = vpop.f32.mrb[0].mxu0
      %v529 = vpop.f32.mrb[0].mxu0
      %v530 = vpop.f32.mrb[0].mxu0
      %v531 = vadd.f32 0.0, %v530
      %v532 = vpop.f32.mrb[0].mxu0
      %533 = vmatprep.mubr.bf16.mxu0 0
      %534 = vmatmul.mubr.bf16.gmra.mrb[0].mxu0 %v431
      %v535 = vpop.f32.mrb[0].mxu0
      %v536 = vadd.f32 0.0, %v535
      %v537 = vpop.f32.mrb[0].mxu0
      %v538 = vpop.f32.mrb[0].mxu0
      %v539 = vpop.f32.mrb[0].mxu0
      %540 = vmatprep.mubr.bf16.mxu0 0
      %541 = vmatmul.mubr.bf16.gmra.mrb[0].mxu0 %v434
      %v542 = vpop.f32.mrb[0].mxu0
      %v543 = vadd.f32 0.0, %v542
      %v544 = vpop.f32.mrb[0].mxu0
      %v545 = vpop.f32.mrb[0].mxu0
      %v546 = vadd.f32 0.0, %v545
      %v547 = vpop.f32.mrb[0].mxu0
      %548 = vmatprep.mubr.bf16.mxu0 0
      %549 = vmatmul.mubr.bf16.gmra.mrb[0].mxu0 %v437
      %v550 = vpop.f32.mrb[0].mxu0
      %v551 = vpop.f32.mrb[0].mxu0
      %v552 = vpop.f32.mrb[0].mxu0
      %v553 = vadd.f32 0.0, %v552
      %v554 = vpop.f32.mrb[0].mxu0
      %555 = vmatprep.mubr.bf16.mxu0 0
      %556 = vmatmul.mubr.bf16.gmra.mrb[0].mxu0 %v440
      %v557 = vpop.f32.mrb[0].mxu0
      %v558 = vadd.f32 0.0, %v557
      %v559 = vpop.f32.mrb[0].mxu0
      %v560 = vpop.f32.mrb[0].mxu0
      %v561 = vpop.f32.mrb[0].mxu0
      %562 = vdwg.mxu0
      %v563 = vadd.f32 %v283, %v477
      %v564 = vadd.f32 %v283, %v480
      %v565 = vadd.f32 %v283, %v487
      %v566 = vadd.f32 %v283, %v492
      %v567 = vadd.f32 %v283, %v499
      %v568 = vadd.f32 %v283, %v502
      %v569 = vadd.f32 %v283, %v509
      %v570 = vadd.f32 %v283, %v514
      %v571 = vadd.f32 %v283, %v521
      %v572 = vadd.f32 %v283, %v524
      %v573 = vadd.f32 %v283, %v531
      %v574 = vadd.f32 %v283, %v536
      %v575 = vadd.f32 %v283, %v543
      %v576 = vadd.f32 %v283, %v546
      %v577 = vadd.f32 %v283, %v553
      %v578 = vadd.f32 %v283, %v558
      %v579 = vld [vmem:[%s226 + $0xc] sm:$0xf]
      %v580 = vld [vmem:[%s226 + $0x10] sm:$0xf]
      %v581 = vld [vmem:[%s226 + $0x14] sm:$0xf]
      %v582 = vld [vmem:[%s226 + $0x18] sm:$0xf]
      %v583 = vld [vmem:[%s226 + $0x1c] sm:$0xf]
      %v584 = vld [vmem:[%s226 + $0x20] sm:$0xf]
      %v585 = vld [vmem:[%s226 + $0x24] sm:$0xf]
      %v586 = vld [vmem:[%s226 + $0x28] sm:$0xf]
      %v587 = vld [vmem:[%s226 + $0x2c] sm:$0xf]
      %v588 = vld [vmem:[%s226 + $0x30] sm:$0xf]
      %v589 = vld [vmem:[%s226 + $0x34] sm:$0xf]
      %v590 = vld [vmem:[%s226 + $0x38] sm:$0xf]
      %v591 = vld [vmem:[%s226 + $0x3c] sm:$0xf]
      %v592 = vld [vmem:[%s226 + $0x40] sm:$0xf]
      %v593 = vld [vmem:[%s226 + $0x44] sm:$0xf]
      %v594 = vld [vmem:[%s226 + $0x48] sm:$0xf]
      %v595 = vld [vmem:[%s226 + $0x4c] sm:$0xf]
      %v596 = vld [vmem:[%s226 + $0x50] sm:$0xf]
      %v597 = vld [vmem:[%s226 + $0x54] sm:$0xf]
      %v598 = vld [vmem:[%s226 + $0x58] sm:$0xf]
      %v599 = vld [vmem:[%s226 + $0x5c] sm:$0xf]
      %v600 = vld [vmem:[%s226 + $0x60] sm:$0xf]
      %v601 = vld [vmem:[%s226 + $0x64] sm:$0xf]
      %v602 = vld [vmem:[%s226 + $0x68] sm:$0xf]
      %v627 = vunpack.c.l.b16 %v579
      %v628 = vunpack.c.l.b16 %v580
      %v629 = vunpack.c.l.b16 %v581
      %v630 = vunpack.c.l.b16 %v582
      %v631 = vunpack.c.l.b16 %v583
      %v632 = vunpack.c.l.b16 %v584
      %v633 = vunpack.c.l.b16 %v585
      %v634 = vunpack.c.l.b16 %v586
      %v635 = vunpack.c.l.b16 %v587
      %v636 = vunpack.c.l.b16 %v588
      %v637 = vunpack.c.l.b16 %v589
      %v638 = vunpack.c.l.b16 %v590
      %v639 = vunpack.c.l.b16 %v591
      %v640 = vunpack.c.l.b16 %v592
      %v641 = vunpack.c.l.b16 %v593
      %v642 = vunpack.c.l.b16 %v594
      %v643 = vunpack.c.l.b16 %v595
      %v644 = vunpack.c.l.b16 %v596
      %v645 = vunpack.c.l.b16 %v597
      %v646 = vunpack.c.l.b16 %v598
      %v647 = vunpack.c.l.b16 %v599
      %v648 = vunpack.c.l.b16 %v600
      %v649 = vunpack.c.l.b16 %v601
      %v650 = vunpack.c.l.b16 %v602
      %v651 = vpack.c.b16 %v628, %v627
      %v652 = vpack.c.b16 %v630, %v629
      %v653 = vpack.c.b16 %v632, %v631
      %v654 = vpack.c.b16 %v634, %v633
      %v655 = vpack.c.b16 %v636, %v635
      %v656 = vpack.c.b16 %v638, %v637
      %v657 = vpack.c.b16 %v640, %v639
      %v658 = vpack.c.b16 %v642, %v641
      %v659 = vpack.c.b16 %v644, %v643
      %v660 = vpack.c.b16 %v646, %v645
      %v661 = vpack.c.b16 %v648, %v647
      %v662 = vpack.c.b16 %v650, %v649
      %v675 = vunpack.c.l.b16 %v254
      %v676 = vunpack.c.l.b16 %v255
      %v677 = vunpack.c.l.b16 %v256
      %v678 = vunpack.c.l.b16 %v257
      %v679 = vunpack.c.l.b16 %v258
      %v680 = vunpack.c.l.b16 %v259
      %v681 = vunpack.c.l.b16 %v260
      %v682 = vunpack.c.l.b16 %v261
      %v683 = vunpack.c.l.b16 %v262
      %v684 = vunpack.c.l.b16 %v263
      %v685 = vunpack.c.l.b16 %v264
      %v686 = vunpack.c.l.b16 %v265
      %v687 = vpack.c.b16 %v676, %v675
      %v688 = vpack.c.b16 %v678, %v677
      %v689 = vpack.c.b16 %v680, %v679
      %v690 = vpack.c.b16 %v682, %v681
      %v691 = vpack.c.b16 %v684, %v683
      %v692 = vpack.c.b16 %v686, %v685
      %v700 = vsel %vm405, %v651, 0
      %v703 = vsel %vm405, %v652, 0
      %v706 = vsel %vm405, %v653, 0
      %v709 = vsel %vm405, %v654, 0
      %v712 = vsel %vm405, %v655, 0
      %v715 = vsel %vm405, %v656, 0
      %v718 = vsel %vm405, %v657, 0
      %v721 = vsel %vm405, %v658, 0
      %v724 = vsel %vm405, %v659, 0
      %v727 = vsel %vm405, %v660, 0
      %v730 = vsel %vm405, %v661, 0
      %v733 = vsel %vm405, %v662, 0
      %735 = vmatprep.subr.bf16.mxu0 0
      %736 = vmatpush1.bf16.msra.mxu0 %v687
      %737 = vmatprep.subr.bf16.mxu0 0
      %738 = vmatpush1.bf16.msra.mxu0 %v688
      %739 = vmatprep.subr.bf16.mxu0 0
      %740 = vmatpush1.bf16.msra.mxu0 %v689
      %741 = vmatprep.subr.bf16.mxu0 0
      %742 = vmatpush1.bf16.msra.mxu0 %v690
      %743 = vmatprep.subr.bf16.mxu0 0
      %744 = vmatpush1.bf16.msra.mxu0 %v691
      %745 = vmatprep.subr.bf16.mxu0 0
      %746 = vmatpush1.bf16.msra.mxu0 %v692
      %747 = vmatprep.subr.bf16.mxu0 0
      %748 = vmatpush1.bf16.msra.mxu0 0
      %749 = vmatprep.subr.bf16.mxu0 0
      %750 = vmatpush1.bf16.msra.mxu0 0
      %751 = vmatprep.subr.bf16.mxu0 0
      %752 = vmatpush1.bf16.msra.mxu0 0
      %753 = vmatprep.subr.bf16.mxu0 0
      %754 = vmatpush1.bf16.msra.mxu0 0
      %755 = vmatprep.subr.bf16.mxu0 0
      %756 = vmatpush1.bf16.msra.mxu0 0
      %757 = vmatprep.subr.bf16.mxu0 0
      %758 = vmatpush1.bf16.msra.mxu0 0
      %759 = vmatprep.subr.bf16.mxu0 0
      %760 = vmatpush1.bf16.msra.mxu0 0
      %761 = vmatprep.subr.bf16.mxu0 0
      %762 = vmatpush1.bf16.msra.mxu0 0
      %763 = vmatprep.subr.bf16.mxu0 0
      %764 = vmatpush1.bf16.msra.mxu0 0
      %765 = vmatprep.subr.bf16.mxu0 0
      %766 = vmatpush1.bf16.msra.mxu0 0
      %767 = vmatprep.mubr.bf16.mxu0 0
      %768 = vmatmul.mubr.bf16.gmra.mrb[0].mxu0 %v700
      %v769 = vpop.f32.mrb[0].mxu0
      %v770 = vadd.f32 0.0, %v769
      %v771 = vpop.f32.mrb[0].mxu0
      %v772 = vpop.f32.mrb[0].mxu0
      %v773 = vadd.f32 0.0, %v772
      %v774 = vpop.f32.mrb[0].mxu0
      %775 = vmatprep.mubr.bf16.mxu0 0
      %776 = vmatmul.mubr.bf16.gmra.mrb[0].mxu0 %v703
      %v777 = vpop.f32.mrb[0].mxu0
      %v778 = vpop.f32.mrb[0].mxu0
      %v779 = vpop.f32.mrb[0].mxu0
      %v780 = vadd.f32 0.0, %v779
      %v781 = vpop.f32.mrb[0].mxu0
      %782 = vmatprep.mubr.bf16.mxu0 0
      %783 = vmatmul.mubr.bf16.gmra.mrb[0].mxu0 %v706
      %v784 = vpop.f32.mrb[0].mxu0
      %v785 = vadd.f32 0.0, %v784
      %v786 = vpop.f32.mrb[0].mxu0
      %v787 = vpop.f32.mrb[0].mxu0
      %v788 = vpop.f32.mrb[0].mxu0
      %789 = vmatprep.mubr.bf16.mxu0 0
      %790 = vmatmul.mubr.bf16.gmra.mrb[0].mxu0 %v709
      %v791 = vpop.f32.mrb[0].mxu0
      %v792 = vadd.f32 0.0, %v791
      %v793 = vpop.f32.mrb[0].mxu0
      %v794 = vpop.f32.mrb[0].mxu0
      %v795 = vadd.f32 0.0, %v794
      %v796 = vpop.f32.mrb[0].mxu0
      %797 = vmatprep.mubr.bf16.mxu0 0
      %798 = vmatmul.mubr.bf16.gmra.mrb[0].mxu0 %v712
      %v799 = vpop.f32.mrb[0].mxu0
      %v800 = vpop.f32.mrb[0].mxu0
      %v801 = vpop.f32.mrb[0].mxu0
      %v802 = vadd.f32 0.0, %v801
      %v803 = vpop.f32.mrb[0].mxu0
      %804 = vmatprep.mubr.bf16.mxu0 0
      %805 = vmatmul.mubr.bf16.gmra.mrb[0].mxu0 %v715
      %v806 = vpop.f32.mrb[0].mxu0
      %v807 = vadd.f32 0.0, %v806
      %v808 = vpop.f32.mrb[0].mxu0
      %v809 = vpop.f32.mrb[0].mxu0
      %v810 = vpop.f32.mrb[0].mxu0
      %811 = vmatprep.mubr.bf16.mxu0 0
      %812 = vmatmul.mubr.bf16.gmra.mrb[0].mxu0 %v718
      %v813 = vpop.f32.mrb[0].mxu0
      %v814 = vadd.f32 0.0, %v813
      %v815 = vpop.f32.mrb[0].mxu0
      %v816 = vpop.f32.mrb[0].mxu0
      %v817 = vadd.f32 0.0, %v816
      %v818 = vpop.f32.mrb[0].mxu0
      %819 = vmatprep.mubr.bf16.mxu0 0
      %820 = vmatmul.mubr.bf16.gmra.mrb[0].mxu0 %v721
      %v821 = vpop.f32.mrb[0].mxu0
      %v822 = vpop.f32.mrb[0].mxu0
      %v823 = vpop.f32.mrb[0].mxu0
      %v824 = vadd.f32 0.0, %v823
      %v825 = vpop.f32.mrb[0].mxu0
      %826 = vmatprep.mubr.bf16.mxu0 0
      %827 = vmatmul.mubr.bf16.gmra.mrb[0].mxu0 %v724
      %v828 = vpop.f32.mrb[0].mxu0
      %v829 = vadd.f32 0.0, %v828
      %v830 = vpop.f32.mrb[0].mxu0
      %v831 = vpop.f32.mrb[0].mxu0
      %v832 = vpop.f32.mrb[0].mxu0
      %833 = vmatprep.mubr.bf16.mxu0 0
      %834 = vmatmul.mubr.bf16.gmra.mrb[0].mxu0 %v727
      %v835 = vpop.f32.mrb[0].mxu0
      %v836 = vadd.f32 0.0, %v835
      %v837 = vpop.f32.mrb[0].mxu0
      %v838 = vpop.f32.mrb[0].mxu0
      %v839 = vadd.f32 0.0, %v838
      %v840 = vpop.f32.mrb[0].mxu0
      %841 = vmatprep.mubr.bf16.mxu0 0
      %842 = vmatmul.mubr.bf16.gmra.mrb[0].mxu0 %v730
      %v843 = vpop.f32.mrb[0].mxu0
      %v844 = vpop.f32.mrb[0].mxu0
      %v845 = vpop.f32.mrb[0].mxu0
      %v846 = vadd.f32 0.0, %v845
      %v847 = vpop.f32.mrb[0].mxu0
      %848 = vmatprep.mubr.bf16.mxu0 0
      %849 = vmatmul.mubr.bf16.gmra.mrb[0].mxu0 %v733
      %v850 = vpop.f32.mrb[0].mxu0
      %v851 = vadd.f32 0.0, %v850
      %v852 = vpop.f32.mrb[0].mxu0
      %v853 = vpop.f32.mrb[0].mxu0
      %v854 = vpop.f32.mrb[0].mxu0
      %855 = vdwg.mxu0
      %v856 = vadd.f32 %v563, %v770
      %v857 = vadd.f32 %v564, %v773
      %v858 = vadd.f32 %v565, %v780
      %v859 = vadd.f32 %v566, %v785
      %v860 = vadd.f32 %v567, %v792
      %v861 = vadd.f32 %v568, %v795
      %v862 = vadd.f32 %v569, %v802
      %v863 = vadd.f32 %v570, %v807
      %v864 = vadd.f32 %v571, %v814
      %v865 = vadd.f32 %v572, %v817
      %v866 = vadd.f32 %v573, %v824
      %v867 = vadd.f32 %v574, %v829
      %v868 = vadd.f32 %v575, %v836
      %v869 = vadd.f32 %v576, %v839
      %v870 = vadd.f32 %v577, %v846
      %v871 = vadd.f32 %v578, %v851
      %v872 = vld [vmem:[%s226 + $0x18] sm:$0xf]
      %v873 = vld [vmem:[%s226 + $0x1c] sm:$0xf]
      %v874 = vld [vmem:[%s226 + $0x20] sm:$0xf]
      %v875 = vld [vmem:[%s226 + $0x24] sm:$0xf]
      %v876 = vld [vmem:[%s226 + $0x28] sm:$0xf]
      %v877 = vld [vmem:[%s226 + $0x2c] sm:$0xf]
      %v878 = vld [vmem:[%s226 + $0x30] sm:$0xf]
      %v879 = vld [vmem:[%s226 + $0x34] sm:$0xf]
      %v880 = vld [vmem:[%s226 + $0x38] sm:$0xf]
      %v881 = vld [vmem:[%s226 + $0x3c] sm:$0xf]
      %v882 = vld [vmem:[%s226 + $0x40] sm:$0xf]
      %v883 = vld [vmem:[%s226 + $0x44] sm:$0xf]
      %v884 = vld [vmem:[%s226 + $0x48] sm:$0xf]
      %v885 = vld [vmem:[%s226 + $0x4c] sm:$0xf]
      %v886 = vld [vmem:[%s226 + $0x50] sm:$0xf]
      %v887 = vld [vmem:[%s226 + $0x54] sm:$0xf]
      %v888 = vld [vmem:[%s226 + $0x58] sm:$0xf]
      %v889 = vld [vmem:[%s226 + $0x5c] sm:$0xf]
      %v890 = vld [vmem:[%s226 + $0x60] sm:$0xf]
      %v891 = vld [vmem:[%s226 + $0x64] sm:$0xf]
      %v892 = vld [vmem:[%s226 + $0x68] sm:$0xf]
      %v893 = vld [vmem:[%s226 + $0x6c] sm:$0xf]
      %v894 = vld [vmem:[%s226 + $0x70] sm:$0xf]
      %v895 = vld [vmem:[%s226 + $0x74] sm:$0xf]
      %v920 = vunpack.c.l.b16 %v872
      %v921 = vunpack.c.l.b16 %v873
      %v922 = vunpack.c.l.b16 %v874
      %v923 = vunpack.c.l.b16 %v875
      %v924 = vunpack.c.l.b16 %v876
      %v925 = vunpack.c.l.b16 %v877
      %v926 = vunpack.c.l.b16 %v878
      %v927 = vunpack.c.l.b16 %v879
      %v928 = vunpack.c.l.b16 %v880
      %v929 = vunpack.c.l.b16 %v881
      %v930 = vunpack.c.l.b16 %v882
      %v931 = vunpack.c.l.b16 %v883
      %v932 = vunpack.c.l.b16 %v884
      %v933 = vunpack.c.l.b16 %v885
      %v934 = vunpack.c.l.b16 %v886
      %v935 = vunpack.c.l.b16 %v887
      %v936 = vunpack.c.l.b16 %v888
      %v937 = vunpack.c.l.b16 %v889
      %v938 = vunpack.c.l.b16 %v890
      %v939 = vunpack.c.l.b16 %v891
      %v940 = vunpack.c.l.b16 %v892
      %v941 = vunpack.c.l.b16 %v893
      %v942 = vunpack.c.l.b16 %v894
      %v943 = vunpack.c.l.b16 %v895
      %v944 = vpack.c.b16 %v921, %v920
      %v945 = vpack.c.b16 %v923, %v922
      %v946 = vpack.c.b16 %v925, %v924
      %v947 = vpack.c.b16 %v927, %v926
      %v948 = vpack.c.b16 %v929, %v928
      %v949 = vpack.c.b16 %v931, %v930
      %v950 = vpack.c.b16 %v933, %v932
      %v951 = vpack.c.b16 %v935, %v934
      %v952 = vpack.c.b16 %v937, %v936
      %v953 = vpack.c.b16 %v939, %v938
      %v954 = vpack.c.b16 %v941, %v940
      %v955 = vpack.c.b16 %v943, %v942
      %v968 = vunpack.c.l.b16 %v267
      %v969 = vunpack.c.l.b16 %v268
      %v970 = vunpack.c.l.b16 %v269
      %v971 = vunpack.c.l.b16 %v270
      %v972 = vunpack.c.l.b16 %v271
      %v973 = vunpack.c.l.b16 %v272
      %v974 = vunpack.c.l.b16 %v273
      %v975 = vunpack.c.l.b16 %v274
      %v976 = vunpack.c.l.b16 %v275
      %v977 = vunpack.c.l.b16 %v276
      %v978 = vunpack.c.l.b16 %v277
      %v979 = vunpack.c.l.b16 %v278
      %v980 = vpack.c.b16 %v969, %v968
      %v981 = vpack.c.b16 %v971, %v970
      %v982 = vpack.c.b16 %v973, %v972
      %v983 = vpack.c.b16 %v975, %v974
      %v984 = vpack.c.b16 %v977, %v976
      %v985 = vpack.c.b16 %v979, %v978
      %v993 = vsel %vm405, %v944, 0
      %v996 = vsel %vm405, %v945, 0
      %v999 = vsel %vm405, %v946, 0
      %v1002 = vsel %vm405, %v947, 0
      %v1005 = vsel %vm405, %v948, 0
      %v1008 = vsel %vm405, %v949, 0
      %v1011 = vsel %vm405, %v950, 0
      %v1014 = vsel %vm405, %v951, 0
      %v1017 = vsel %vm405, %v952, 0
      %v1020 = vsel %vm405, %v953, 0
      %v1023 = vsel %vm405, %v954, 0
      %v1026 = vsel %vm405, %v955, 0
      %1028 = vmatprep.subr.bf16.mxu0 0
      %1029 = vmatpush1.bf16.msra.mxu0 %v980
      %1030 = vmatprep.subr.bf16.mxu0 0
      %1031 = vmatpush1.bf16.msra.mxu0 %v981
      %1032 = vmatprep.subr.bf16.mxu0 0
      %1033 = vmatpush1.bf16.msra.mxu0 %v982
      %1034 = vmatprep.subr.bf16.mxu0 0
      %1035 = vmatpush1.bf16.msra.mxu0 %v983
      %1036 = vmatprep.subr.bf16.mxu0 0
      %1037 = vmatpush1.bf16.msra.mxu0 %v984
      %1038 = vmatprep.subr.bf16.mxu0 0
      %1039 = vmatpush1.bf16.msra.mxu0 %v985
      %1040 = vmatprep.subr.bf16.mxu0 0
      %1041 = vmatpush1.bf16.msra.mxu0 0
      %1042 = vmatprep.subr.bf16.mxu0 0
      %1043 = vmatpush1.bf16.msra.mxu0 0
      %1044 = vmatprep.subr.bf16.mxu0 0
      %1045 = vmatpush1.bf16.msra.mxu0 0
      %1046 = vmatprep.subr.bf16.mxu0 0
      %1047 = vmatpush1.bf16.msra.mxu0 0
      %1048 = vmatprep.subr.bf16.mxu0 0
      %1049 = vmatpush1.bf16.msra.mxu0 0
      %1050 = vmatprep.subr.bf16.mxu0 0
      %1051 = vmatpush1.bf16.msra.mxu0 0
      %1052 = vmatprep.subr.bf16.mxu0 0
      %1053 = vmatpush1.bf16.msra.mxu0 0
      %1054 = vmatprep.subr.bf16.mxu0 0
      %1055 = vmatpush1.bf16.msra.mxu0 0
      %1056 = vmatprep.subr.bf16.mxu0 0
      %1057 = vmatpush1.bf16.msra.mxu0 0
      %1058 = vmatprep.subr.bf16.mxu0 0
      %1059 = vmatpush1.bf16.msra.mxu0 0
      %1060 = vmatprep.mubr.bf16.mxu0 0
      %1061 = vmatmul.mubr.bf16.gmra.mrb[0].mxu0 %v993
      %v1062 = vpop.f32.mrb[0].mxu0
      %v1063 = vadd.f32 0.0, %v1062
      %v1064 = vpop.f32.mrb[0].mxu0
      %v1065 = vpop.f32.mrb[0].mxu0
      %v1066 = vadd.f32 0.0, %v1065
      %v1067 = vpop.f32.mrb[0].mxu0
      %1068 = vmatprep.mubr.bf16.mxu0 0
      %1069 = vmatmul.mubr.bf16.gmra.mrb[0].mxu0 %v996
      %v1070 = vpop.f32.mrb[0].mxu0
      %v1071 = vpop.f32.mrb[0].mxu0
      %v1072 = vpop.f32.mrb[0].mxu0
      %v1073 = vadd.f32 0.0, %v1072
      %v1074 = vpop.f32.mrb[0].mxu0
      %1075 = vmatprep.mubr.bf16.mxu0 0
      %1076 = vmatmul.mubr.bf16.gmra.mrb[0].mxu0 %v999
      %v1077 = vpop.f32.mrb[0].mxu0
      %v1078 = vadd.f32 0.0, %v1077
      %v1079 = vpop.f32.mrb[0].mxu0
      %v1080 = vpop.f32.mrb[0].mxu0
      %v1081 = vpop.f32.mrb[0].mxu0
      %1082 = vmatprep.mubr.bf16.mxu0 0
      %1083 = vmatmul.mubr.bf16.gmra.mrb[0].mxu0 %v1002
      %v1084 = vpop.f32.mrb[0].mxu0
      %v1085 = vadd.f32 0.0, %v1084
      %v1086 = vpop.f32.mrb[0].mxu0
      %v1087 = vpop.f32.mrb[0].mxu0
      %v1088 = vadd.f32 0.0, %v1087
      %v1089 = vpop.f32.mrb[0].mxu0
      %1090 = vmatprep.mubr.bf16.mxu0 0
      %1091 = vmatmul.mubr.bf16.gmra.mrb[0].mxu0 %v1005
      %v1092 = vpop.f32.mrb[0].mxu0
      %v1093 = vpop.f32.mrb[0].mxu0
      %v1094 = vpop.f32.mrb[0].mxu0
      %v1095 = vadd.f32 0.0, %v1094
      %v1096 = vpop.f32.mrb[0].mxu0
      %1097 = vmatprep.mubr.bf16.mxu0 0
      %1098 = vmatmul.mubr.bf16.gmra.mrb[0].mxu0 %v1008
      %v1099 = vpop.f32.mrb[0].mxu0
      %v1100 = vadd.f32 0.0, %v1099
      %v1101 = vpop.f32.mrb[0].mxu0
      %v1102 = vpop.f32.mrb[0].mxu0
      %v1103 = vpop.f32.mrb[0].mxu0
      %1104 = vmatprep.mubr.bf16.mxu0 0
      %1105 = vmatmul.mubr.bf16.gmra.mrb[0].mxu0 %v1011
      %v1106 = vpop.f32.mrb[0].mxu0
      %v1107 = vadd.f32 0.0, %v1106
      %v1108 = vpop.f32.mrb[0].mxu0
      %v1109 = vpop.f32.mrb[0].mxu0
      %v1110 = vadd.f32 0.0, %v1109
      %v1111 = vpop.f32.mrb[0].mxu0
      %1112 = vmatprep.mubr.bf16.mxu0 0
      %1113 = vmatmul.mubr.bf16.gmra.mrb[0].mxu0 %v1014
      %v1114 = vpop.f32.mrb[0].mxu0
      %v1115 = vpop.f32.mrb[0].mxu0
      %v1116 = vpop.f32.mrb[0].mxu0
      %v1117 = vadd.f32 0.0, %v1116
      %v1118 = vpop.f32.mrb[0].mxu0
      %1119 = vmatprep.mubr.bf16.mxu0 0
      %1120 = vmatmul.mubr.bf16.gmra.mrb[0].mxu0 %v1017
      %v1121 = vpop.f32.mrb[0].mxu0
      %v1122 = vadd.f32 0.0, %v1121
      %v1123 = vpop.f32.mrb[0].mxu0
      %v1124 = vpop.f32.mrb[0].mxu0
      %v1125 = vpop.f32.mrb[0].mxu0
      %1126 = vmatprep.mubr.bf16.mxu0 0
      %1127 = vmatmul.mubr.bf16.gmra.mrb[0].mxu0 %v1020
      %v1128 = vpop.f32.mrb[0].mxu0
      %v1129 = vadd.f32 0.0, %v1128
      %v1130 = vpop.f32.mrb[0].mxu0
      %v1131 = vpop.f32.mrb[0].mxu0
      %v1132 = vadd.f32 0.0, %v1131
      %v1133 = vpop.f32.mrb[0].mxu0
      %1134 = vmatprep.mubr.bf16.mxu0 0
      %1135 = vmatmul.mubr.bf16.gmra.mrb[0].mxu0 %v1023
      %v1136 = vpop.f32.mrb[0].mxu0
      %v1137 = vpop.f32.mrb[0].mxu0
      %v1138 = vpop.f32.mrb[0].mxu0
      %v1139 = vadd.f32 0.0, %v1138
      %v1140 = vpop.f32.mrb[0].mxu0
      %1141 = vmatprep.mubr.bf16.mxu0 0
      %1142 = vmatmul.mubr.bf16.gmra.mrb[0].mxu0 %v1026
      %v1143 = vpop.f32.mrb[0].mxu0
      %v1144 = vadd.f32 0.0, %v1143
      %v1145 = vpop.f32.mrb[0].mxu0
      %v1146 = vpop.f32.mrb[0].mxu0
      %v1147 = vpop.f32.mrb[0].mxu0
      %1148 = vdwg.mxu0
      %v1149 = vadd.f32 %v856, %v1063
      %v1150 = vadd.f32 %v857, %v1066
      %v1151 = vadd.f32 %v858, %v1073
      %v1152 = vadd.f32 %v859, %v1078
      %v1153 = vadd.f32 %v860, %v1085
      %v1154 = vadd.f32 %v861, %v1088
      %v1155 = vadd.f32 %v862, %v1095
      %v1156 = vadd.f32 %v863, %v1100
      %v1157 = vadd.f32 %v864, %v1107
      %v1158 = vadd.f32 %v865, %v1110
      %v1159 = vadd.f32 %v866, %v1117
      %v1160 = vadd.f32 %v867, %v1122
      %v1161 = vadd.f32 %v868, %v1129
      %v1162 = vadd.f32 %v869, %v1132
      %v1163 = vadd.f32 %v870, %v1139
      %v1164 = vadd.f32 %v871, %v1144
      %vm1165 = vcmp.ge.f32.partialorder %v1149, 0.0
      %vm1166 = vcmp.ge.f32.partialorder %v1150, 0.0
      %vm1167 = vcmp.ge.f32.partialorder %v1151, 0.0
      %vm1168 = vcmp.ge.f32.partialorder %v1152, 0.0
      %vm1169 = vcmp.ge.f32.partialorder %v1153, 0.0
      %vm1170 = vcmp.ge.f32.partialorder %v1154, 0.0
      %vm1171 = vcmp.ge.f32.partialorder %v1155, 0.0
      %vm1172 = vcmp.ge.f32.partialorder %v1156, 0.0
      %vm1173 = vcmp.ge.f32.partialorder %v1157, 0.0
      %vm1174 = vcmp.ge.f32.partialorder %v1158, 0.0
      %vm1175 = vcmp.ge.f32.partialorder %v1159, 0.0
      %vm1176 = vcmp.ge.f32.partialorder %v1160, 0.0
      %vm1177 = vcmp.ge.f32.partialorder %v1161, 0.0
      %vm1178 = vcmp.ge.f32.partialorder %v1162, 0.0
      %vm1179 = vcmp.ge.f32.partialorder %v1163, 0.0
      %vm1180 = vcmp.ge.f32.partialorder %v1164, 0.0
      %v1181 = vstv %s239
      %v1182 = vmul.f32 %v1181, %v1149
      %v1183 = vmul.f32 %v1181, %v1150
      %v1184 = vmul.f32 %v1181, %v1151
      %v1185 = vmul.f32 %v1181, %v1152
      %v1186 = vmul.f32 %v1181, %v1153
      %v1187 = vmul.f32 %v1181, %v1154
      %v1188 = vmul.f32 %v1181, %v1155
      %v1189 = vmul.f32 %v1181, %v1156
      %v1190 = vmul.f32 %v1181, %v1157
      %v1191 = vmul.f32 %v1181, %v1158
      %v1192 = vmul.f32 %v1181, %v1159
      %v1193 = vmul.f32 %v1181, %v1160
      %v1194 = vmul.f32 %v1181, %v1161
      %v1195 = vmul.f32 %v1181, %v1162
      %v1196 = vmul.f32 %v1181, %v1163
      %v1197 = vmul.f32 %v1181, %v1164
      %v1198 = vsel %vm1165, %v1149, %v1182
      %v1199 = vsel %vm1166, %v1150, %v1183
      %v1200 = vsel %vm1167, %v1151, %v1184
      %v1201 = vsel %vm1168, %v1152, %v1185
      %v1202 = vsel %vm1169, %v1153, %v1186
      %v1203 = vsel %vm1170, %v1154, %v1187
      %v1204 = vsel %vm1171, %v1155, %v1188
      %v1205 = vsel %vm1172, %v1156, %v1189
      %v1206 = vsel %vm1173, %v1157, %v1190
      %v1207 = vsel %vm1174, %v1158, %v1191
      %v1208 = vsel %vm1175, %v1159, %v1192
      %v1209 = vsel %vm1176, %v1160, %v1193
      %v1210 = vsel %vm1177, %v1161, %v1194
      %v1211 = vsel %vm1178, %v1162, %v1195
      %v1212 = vsel %vm1179, %v1163, %v1196
      %v1213 = vsel %vm1180, %v1164, %v1197
      %v1214 = vpack.c.bf16 %v1199, %v1198
      %v1215 = vpack.c.bf16 %v1201, %v1200
      %v1216 = vpack.c.bf16 %v1203, %v1202
      %v1217 = vpack.c.bf16 %v1205, %v1204
      %v1218 = vpack.c.bf16 %v1207, %v1206
      %v1219 = vpack.c.bf16 %v1209, %v1208
      %v1220 = vpack.c.bf16 %v1211, %v1210
      %v1221 = vpack.c.bf16 %v1213, %v1212
      %v1230 = vunpack.c.l.b16 %v1214
      %v1231 = vunpack.c.h.b16 %v1214
      %v1232 = vunpack.c.l.b16 %v1215
      %v1233 = vunpack.c.h.b16 %v1215
      %v1234 = vunpack.c.l.b16 %v1216
      %v1235 = vunpack.c.h.b16 %v1216
      %v1236 = vunpack.c.l.b16 %v1217
      %v1237 = vunpack.c.h.b16 %v1217
      %v1238 = vunpack.c.l.b16 %v1218
      %v1239 = vunpack.c.h.b16 %v1218
      %v1240 = vunpack.c.l.b16 %v1219
      %v1241 = vunpack.c.h.b16 %v1219
      %v1242 = vunpack.c.l.b16 %v1220
      %v1243 = vunpack.c.h.b16 %v1220
      %v1244 = vunpack.c.l.b16 %v1221
      %v1245 = vunpack.c.h.b16 %v1221
      %v1246 = vpack.c.b16 %v1230, %v1230
      %v1247 = vpack.c.b16 %v1231, %v1231
      %v1248 = vpack.c.b16 %v1232, %v1232
      %v1249 = vpack.c.b16 %v1233, %v1233
      %v1250 = vpack.c.b16 %v1234, %v1234
      %v1251 = vpack.c.b16 %v1235, %v1235
      %v1252 = vpack.c.b16 %v1236, %v1236
      %v1253 = vpack.c.b16 %v1237, %v1237
      %v1254 = vpack.c.b16 %v1238, %v1238
      %v1255 = vpack.c.b16 %v1239, %v1239
      %v1256 = vpack.c.b16 %v1240, %v1240
      %v1257 = vpack.c.b16 %v1241, %v1241
      %v1258 = vpack.c.b16 %v1242, %v1242
      %v1259 = vpack.c.b16 %v1243, %v1243
      %v1260 = vpack.c.b16 %v1244, %v1244
      %v1261 = vpack.c.b16 %v1245, %v1245
      %1278 = vst [vmem:[%s236] sm:$0xf] %v1246
      %1279 = vst [vmem:[%s236 + $0x4] sm:$0xf] %v1247
      %1280 = vst [vmem:[%s236 + $0x8] sm:$0xf] %v1248
      %1281 = vst [vmem:[%s236 + $0xc] sm:$0xf] %v1249
      %1282 = vst [vmem:[%s236 + $0x10] sm:$0xf] %v1250
      %1283 = vst [vmem:[%s236 + $0x14] sm:$0xf] %v1251
      %1284 = vst [vmem:[%s236 + $0x18] sm:$0xf] %v1252
      %1285 = vst [vmem:[%s236 + $0x1c] sm:$0xf] %v1253
      %1286 = vst [vmem:[%s236 + $0x20] sm:$0xf] %v1254
      %1287 = vst [vmem:[%s236 + $0x24] sm:$0xf] %v1255
      %1288 = vst [vmem:[%s236 + $0x28] sm:$0xf] %v1256
      %1289 = vst [vmem:[%s236 + $0x2c] sm:$0xf] %v1257
      %1290 = vst [vmem:[%s236 + $0x30] sm:$0xf] %v1258
      %1291 = vst [vmem:[%s236 + $0x34] sm:$0xf] %v1259
      %1292 = vst [vmem:[%s236 + $0x38] sm:$0xf] %v1260
      %1293 = vst [vmem:[%s236 + $0x3c] sm:$0xf] %v1261
      %v1294 = vld [vmem:[%s226 + $0x60] sm:$0xf]
      %v1295 = vld [vmem:[%s226 + $0x64] sm:$0xf]
      %v1296 = vld [vmem:[%s226 + $0x68] sm:$0xf]
      %v1297 = vld [vmem:[%s226 + $0x6c] sm:$0xf]
      %v1298 = vld [vmem:[%s226 + $0x70] sm:$0xf]
      %v1299 = vld [vmem:[%s226 + $0x74] sm:$0xf]
      %v1300 = vld [vmem:[%s226 + $0x78] sm:$0xf]
      %v1301 = vld [vmem:[%s226 + $0x7c] sm:$0xf]
      %v1302 = vld [vmem:[%s226 + $0x80] sm:$0xf]
      %v1303 = vld [vmem:[%s226 + $0x84] sm:$0xf]
      %v1304 = vld [vmem:[%s226 + $0x88] sm:$0xf]
      %v1305 = vld [vmem:[%s226 + $0x8c] sm:$0xf]
      %v1306 = vld [vmem:[%s226 + $0x90] sm:$0xf]
      %v1307 = vld [vmem:[%s226 + $0x94] sm:$0xf]
      %v1308 = vld [vmem:[%s226 + $0x98] sm:$0xf]
      %v1309 = vld [vmem:[%s226 + $0x9c] sm:$0xf]
      %v1310 = vld [vmem:[%s226 + $0xa0] sm:$0xf]
      %v1311 = vld [vmem:[%s226 + $0xa4] sm:$0xf]
      %v1312 = vld [vmem:[%s226 + $0xa8] sm:$0xf]
      %v1313 = vld [vmem:[%s226 + $0xac] sm:$0xf]
      %v1314 = vld [vmem:[%s226 + $0xb0] sm:$0xf]
      %v1315 = vld [vmem:[%s226 + $0xb4] sm:$0xf]
      %v1316 = vld [vmem:[%s226 + $0xb8] sm:$0xf]
      %v1317 = vld [vmem:[%s226 + $0xbc] sm:$0xf]
      %v1342 = vunpack.c.l.b16 %v1294
      %v1343 = vunpack.c.l.b16 %v1295
      %v1344 = vunpack.c.l.b16 %v1296
      %v1345 = vunpack.c.l.b16 %v1297
      %v1346 = vunpack.c.l.b16 %v1298
      %v1347 = vunpack.c.l.b16 %v1299
      %v1348 = vunpack.c.l.b16 %v1300
      %v1349 = vunpack.c.l.b16 %v1301
      %v1350 = vunpack.c.l.b16 %v1302
      %v1351 = vunpack.c.l.b16 %v1303
      %v1352 = vunpack.c.l.b16 %v1304
      %v1353 = vunpack.c.l.b16 %v1305
      %v1354 = vunpack.c.l.b16 %v1306
      %v1355 = vunpack.c.l.b16 %v1307
      %v1356 = vunpack.c.l.b16 %v1308
      %v1357 = vunpack.c.l.b16 %v1309
      %v1358 = vunpack.c.l.b16 %v1310
      %v1359 = vunpack.c.l.b16 %v1311
      %v1360 = vunpack.c.l.b16 %v1312
      %v1361 = vunpack.c.l.b16 %v1313
      %v1362 = vunpack.c.l.b16 %v1314
      %v1363 = vunpack.c.l.b16 %v1315
      %v1364 = vunpack.c.l.b16 %v1316
      %v1365 = vunpack.c.l.b16 %v1317
      %v1366 = vpack.c.b16 %v1343, %v1342
      %v1367 = vpack.c.b16 %v1345, %v1344
      %v1368 = vpack.c.b16 %v1347, %v1346
      %v1369 = vpack.c.b16 %v1349, %v1348
      %v1370 = vpack.c.b16 %v1351, %v1350
      %v1371 = vpack.c.b16 %v1353, %v1352
      %v1372 = vpack.c.b16 %v1355, %v1354
      %v1373 = vpack.c.b16 %v1357, %v1356
      %v1374 = vpack.c.b16 %v1359, %v1358
      %v1375 = vpack.c.b16 %v1361, %v1360
      %v1376 = vpack.c.b16 %v1363, %v1362
      %v1377 = vpack.c.b16 %v1365, %v1364
      %v1379 = vsel %vm405, %v1366, 0
      %v1382 = vsel %vm405, %v1367, 0
      %v1385 = vsel %vm405, %v1368, 0
      %v1388 = vsel %vm405, %v1369, 0
      %v1391 = vsel %vm405, %v1370, 0
      %v1394 = vsel %vm405, %v1371, 0
      %v1397 = vsel %vm405, %v1372, 0
      %v1400 = vsel %vm405, %v1373, 0
      %v1403 = vsel %vm405, %v1374, 0
      %v1406 = vsel %vm405, %v1375, 0
      %v1409 = vsel %vm405, %v1376, 0
      %v1412 = vsel %vm405, %v1377, 0
      %1414 = vmatprep.subr.bf16.mxu0 0
      %1415 = vmatpush1.bf16.msra.mxu0 %v393
      %1416 = vmatprep.subr.bf16.mxu0 0
      %1417 = vmatpush1.bf16.msra.mxu0 %v394
      %1418 = vmatprep.subr.bf16.mxu0 0
      %1419 = vmatpush1.bf16.msra.mxu0 %v395
      %1420 = vmatprep.subr.bf16.mxu0 0
      %1421 = vmatpush1.bf16.msra.mxu0 %v396
      %1422 = vmatprep.subr.bf16.mxu0 0
      %1423 = vmatpush1.bf16.msra.mxu0 %v397
      %1424 = vmatprep.subr.bf16.mxu0 0
      %1425 = vmatpush1.bf16.msra.mxu0 %v398
      %1426 = vmatprep.subr.bf16.mxu0 0
      %1427 = vmatpush1.bf16.msra.mxu0 0
      %1428 = vmatprep.subr.bf16.mxu0 0
      %1429 = vmatpush1.bf16.msra.mxu0 0
      %1430 = vmatprep.subr.bf16.mxu0 0
      %1431 = vmatpush1.bf16.msra.mxu0 0
      %1432 = vmatprep.subr.bf16.mxu0 0
      %1433 = vmatpush1.bf16.msra.mxu0 0
      %1434 = vmatprep.subr.bf16.mxu0 0
      %1435 = vmatpush1.bf16.msra.mxu0 0
      %1436 = vmatprep.subr.bf16.mxu0 0
      %1437 = vmatpush1.bf16.msra.mxu0 0
      %1438 = vmatprep.subr.bf16.mxu0 0
      %1439 = vmatpush1.bf16.msra.mxu0 0
      %1440 = vmatprep.subr.bf16.mxu0 0
      %1441 = vmatpush1.bf16.msra.mxu0 0
      %1442 = vmatprep.subr.bf16.mxu0 0
      %1443 = vmatpush1.bf16.msra.mxu0 0
      %1444 = vmatprep.subr.bf16.mxu0 0
      %1445 = vmatpush1.bf16.msra.mxu0 0
      %1446 = vmatprep.mubr.bf16.mxu0 0
      %1447 = vmatmul.mubr.bf16.gmra.mrb[0].mxu0 %v1379
      %v1448 = vpop.f32.mrb[0].mxu0
      %v1449 = vadd.f32 0.0, %v1448
      %v1450 = vpop.f32.mrb[0].mxu0
      %v1451 = vpop.f32.mrb[0].mxu0
      %v1452 = vadd.f32 0.0, %v1451
      %v1453 = vpop.f32.mrb[0].mxu0
      %1454 = vmatprep.mubr.bf16.mxu0 0
      %1455 = vmatmul.mubr.bf16.gmra.mrb[0].mxu0 %v1382
      %v1456 = vpop.f32.mrb[0].mxu0
      %v1457 = vpop.f32.mrb[0].mxu0
      %v1458 = vpop.f32.mrb[0].mxu0
      %v1459 = vadd.f32 0.0, %v1458
      %v1460 = vpop.f32.mrb[0].mxu0
      %1461 = vmatprep.mubr.bf16.mxu0 0
      %1462 = vmatmul.mubr.bf16.gmra.mrb[0].mxu0 %v1385
      %v1463 = vpop.f32.mrb[0].mxu0
      %v1464 = vadd.f32 0.0, %v1463
      %v1465 = vpop.f32.mrb[0].mxu0
      %v1466 = vpop.f32.mrb[0].mxu0
      %v1467 = vpop.f32.mrb[0].mxu0
      %1468 = vmatprep.mubr.bf16.mxu0 0
      %1469 = vmatmul.mubr.bf16.gmra.mrb[0].mxu0 %v1388
      %v1470 = vpop.f32.mrb[0].mxu0
      %v1471 = vadd.f32 0.0, %v1470
      %v1472 = vpop.f32.mrb[0].mxu0
      %v1473 = vpop.f32.mrb[0].mxu0
      %v1474 = vadd.f32 0.0, %v1473
      %v1475 = vpop.f32.mrb[0].mxu0
      %1476 = vmatprep.mubr.bf16.mxu0 0
      %1477 = vmatmul.mubr.bf16.gmra.mrb[0].mxu0 %v1391
      %v1478 = vpop.f32.mrb[0].mxu0
      %v1479 = vpop.f32.mrb[0].mxu0
      %v1480 = vpop.f32.mrb[0].mxu0
      %v1481 = vadd.f32 0.0, %v1480
      %v1482 = vpop.f32.mrb[0].mxu0
      %1483 = vmatprep.mubr.bf16.mxu0 0
      %1484 = vmatmul.mubr.bf16.gmra.mrb[0].mxu0 %v1394
      %v1485 = vpop.f32.mrb[0].mxu0
      %v1486 = vadd.f32 0.0, %v1485
      %v1487 = vpop.f32.mrb[0].mxu0
      %v1488 = vpop.f32.mrb[0].mxu0
      %v1489 = vpop.f32.mrb[0].mxu0
      %1490 = vmatprep.mubr.bf16.mxu0 0
      %1491 = vmatmul.mubr.bf16.gmra.mrb[0].mxu0 %v1397
      %v1492 = vpop.f32.mrb[0].mxu0
      %v1493 = vadd.f32 0.0, %v1492
      %v1494 = vpop.f32.mrb[0].mxu0
      %v1495 = vpop.f32.mrb[0].mxu0
      %v1496 = vadd.f32 0.0, %v1495
      %v1497 = vpop.f32.mrb[0].mxu0
      %1498 = vmatprep.mubr.bf16.mxu0 0
      %1499 = vmatmul.mubr.bf16.gmra.mrb[0].mxu0 %v1400
      %v1500 = vpop.f32.mrb[0].mxu0
      %v1501 = vpop.f32.mrb[0].mxu0
      %v1502 = vpop.f32.mrb[0].mxu0
      %v1503 = vadd.f32 0.0, %v1502
      %v1504 = vpop.f32.mrb[0].mxu0
      %1505 = vmatprep.mubr.bf16.mxu0 0
      %1506 = vmatmul.mubr.bf16.gmra.mrb[0].mxu0 %v1403
      %v1507 = vpop.f32.mrb[0].mxu0
      %v1508 = vadd.f32 0.0, %v1507
      %v1509 = vpop.f32.mrb[0].mxu0
      %v1510 = vpop.f32.mrb[0].mxu0
      %v1511 = vpop.f32.mrb[0].mxu0
      %1512 = vmatprep.mubr.bf16.mxu0 0
      %1513 = vmatmul.mubr.bf16.gmra.mrb[0].mxu0 %v1406
      %v1514 = vpop.f32.mrb[0].mxu0
      %v1515 = vadd.f32 0.0, %v1514
      %v1516 = vpop.f32.mrb[0].mxu0
      %v1517 = vpop.f32.mrb[0].mxu0
      %v1518 = vadd.f32 0.0, %v1517
      %v1519 = vpop.f32.mrb[0].mxu0
      %1520 = vmatprep.mubr.bf16.mxu0 0
      %1521 = vmatmul.mubr.bf16.gmra.mrb[0].mxu0 %v1409
      %v1522 = vpop.f32.mrb[0].mxu0
      %v1523 = vpop.f32.mrb[0].mxu0
      %v1524 = vpop.f32.mrb[0].mxu0
      %v1525 = vadd.f32 0.0, %v1524
      %v1526 = vpop.f32.mrb[0].mxu0
      %1527 = vmatprep.mubr.bf16.mxu0 0
      %1528 = vmatmul.mubr.bf16.gmra.mrb[0].mxu0 %v1412
      %v1529 = vpop.f32.mrb[0].mxu0
      %v1530 = vadd.f32 0.0, %v1529
      %v1531 = vpop.f32.mrb[0].mxu0
      %v1532 = vpop.f32.mrb[0].mxu0
      %v1533 = vpop.f32.mrb[0].mxu0
      %1534 = vdwg.mxu0
      %v1535 = vadd.f32 %v283, %v1449
      %v1536 = vadd.f32 %v283, %v1452
      %v1537 = vadd.f32 %v283, %v1459
      %v1538 = vadd.f32 %v283, %v1464
      %v1539 = vadd.f32 %v283, %v1471
      %v1540 = vadd.f32 %v283, %v1474
      %v1541 = vadd.f32 %v283, %v1481
      %v1542 = vadd.f32 %v283, %v1486
      %v1543 = vadd.f32 %v283, %v1493
      %v1544 = vadd.f32 %v283, %v1496
      %v1545 = vadd.f32 %v283, %v1503
      %v1546 = vadd.f32 %v283, %v1508
      %v1547 = vadd.f32 %v283, %v1515
      %v1548 = vadd.f32 %v283, %v1518
      %v1549 = vadd.f32 %v283, %v1525
      %v1550 = vadd.f32 %v283, %v1530
      %v1551 = vld [vmem:[%s226 + $0x6c] sm:$0xf]
      %v1552 = vld [vmem:[%s226 + $0x70] sm:$0xf]
      %v1553 = vld [vmem:[%s226 + $0x74] sm:$0xf]
      %v1554 = vld [vmem:[%s226 + $0x78] sm:$0xf]
      %v1555 = vld [vmem:[%s226 + $0x7c] sm:$0xf]
      %v1556 = vld [vmem:[%s226 + $0x80] sm:$0xf]
      %v1557 = vld [vmem:[%s226 + $0x84] sm:$0xf]
      %v1558 = vld [vmem:[%s226 + $0x88] sm:$0xf]
      %v1559 = vld [vmem:[%s226 + $0x8c] sm:$0xf]
      %v1560 = vld [vmem:[%s226 + $0x90] sm:$0xf]
      %v1561 = vld [vmem:[%s226 + $0x94] sm:$0xf]
      %v1562 = vld [vmem:[%s226 + $0x98] sm:$0xf]
      %v1563 = vld [vmem:[%s226 + $0x9c] sm:$0xf]
      %v1564 = vld [vmem:[%s226 + $0xa0] sm:$0xf]
      %v1565 = vld [vmem:[%s226 + $0xa4] sm:$0xf]
      %v1566 = vld [vmem:[%s226 + $0xa8] sm:$0xf]
      %v1567 = vld [vmem:[%s226 + $0xac] sm:$0xf]
      %v1568 = vld [vmem:[%s226 + $0xb0] sm:$0xf]
      %v1569 = vld [vmem:[%s226 + $0xb4] sm:$0xf]
      %v1570 = vld [vmem:[%s226 + $0xb8] sm:$0xf]
      %v1571 = vld [vmem:[%s226 + $0xbc] sm:$0xf]
      %v1572 = vld [vmem:[%s226 + $0xc0] sm:$0xf]
      %v1573 = vld [vmem:[%s226 + $0xc4] sm:$0xf]
      %v1574 = vld [vmem:[%s226 + $0xc8] sm:$0xf]
      %v1599 = vunpack.c.l.b16 %v1551
      %v1600 = vunpack.c.l.b16 %v1552
      %v1601 = vunpack.c.l.b16 %v1553
      %v1602 = vunpack.c.l.b16 %v1554
      %v1603 = vunpack.c.l.b16 %v1555
      %v1604 = vunpack.c.l.b16 %v1556
      %v1605 = vunpack.c.l.b16 %v1557
      %v1606 = vunpack.c.l.b16 %v1558
      %v1607 = vunpack.c.l.b16 %v1559
      %v1608 = vunpack.c.l.b16 %v1560
      %v1609 = vunpack.c.l.b16 %v1561
      %v1610 = vunpack.c.l.b16 %v1562
      %v1611 = vunpack.c.l.b16 %v1563
      %v1612 = vunpack.c.l.b16 %v1564
      %v1613 = vunpack.c.l.b16 %v1565
      %v1614 = vunpack.c.l.b16 %v1566
      %v1615 = vunpack.c.l.b16 %v1567
      %v1616 = vunpack.c.l.b16 %v1568
      %v1617 = vunpack.c.l.b16 %v1569
      %v1618 = vunpack.c.l.b16 %v1570
      %v1619 = vunpack.c.l.b16 %v1571
      %v1620 = vunpack.c.l.b16 %v1572
      %v1621 = vunpack.c.l.b16 %v1573
      %v1622 = vunpack.c.l.b16 %v1574
      %v1623 = vpack.c.b16 %v1600, %v1599
      %v1624 = vpack.c.b16 %v1602, %v1601
      %v1625 = vpack.c.b16 %v1604, %v1603
      %v1626 = vpack.c.b16 %v1606, %v1605
      %v1627 = vpack.c.b16 %v1608, %v1607
      %v1628 = vpack.c.b16 %v1610, %v1609
      %v1629 = vpack.c.b16 %v1612, %v1611
      %v1630 = vpack.c.b16 %v1614, %v1613
      %v1631 = vpack.c.b16 %v1616, %v1615
      %v1632 = vpack.c.b16 %v1618, %v1617
      %v1633 = vpack.c.b16 %v1620, %v1619
      %v1634 = vpack.c.b16 %v1622, %v1621
      %v1636 = vsel %vm405, %v1623, 0
      %v1639 = vsel %vm405, %v1624, 0
      %v1642 = vsel %vm405, %v1625, 0
      %v1645 = vsel %vm405, %v1626, 0
      %v1648 = vsel %vm405, %v1627, 0
      %v1651 = vsel %vm405, %v1628, 0
      %v1654 = vsel %vm405, %v1629, 0
      %v1657 = vsel %vm405, %v1630, 0
      %v1660 = vsel %vm405, %v1631, 0
      %v1663 = vsel %vm405, %v1632, 0
      %v1666 = vsel %vm405, %v1633, 0
      %v1669 = vsel %vm405, %v1634, 0
      %1671 = vmatprep.subr.bf16.mxu0 0
      %1672 = vmatpush1.bf16.msra.mxu0 %v687
      %1673 = vmatprep.subr.bf16.mxu0 0
      %1674 = vmatpush1.bf16.msra.mxu0 %v688
      %1675 = vmatprep.subr.bf16.mxu0 0
      %1676 = vmatpush1.bf16.msra.mxu0 %v689
      %1677 = vmatprep.subr.bf16.mxu0 0
      %1678 = vmatpush1.bf16.msra.mxu0 %v690
      %1679 = vmatprep.subr.bf16.mxu0 0
      %1680 = vmatpush1.bf16.msra.mxu0 %v691
      %1681 = vmatprep.subr.bf16.mxu0 0
      %1682 = vmatpush1.bf16.msra.mxu0 %v692
      %1683 = vmatprep.subr.bf16.mxu0 0
      %1684 = vmatpush1.bf16.msra.mxu0 0
      %1685 = vmatprep.subr.bf16.mxu0 0
      %1686 = vmatpush1.bf16.msra.mxu0 0
      %1687 = vmatprep.subr.bf16.mxu0 0
      %1688 = vmatpush1.bf16.msra.mxu0 0
      %1689 = vmatprep.subr.bf16.mxu0 0
      %1690 = vmatpush1.bf16.msra.mxu0 0
      %1691 = vmatprep.subr.bf16.mxu0 0
      %1692 = vmatpush1.bf16.msra.mxu0 0
      %1693 = vmatprep.subr.bf16.mxu0 0
      %1694 = vmatpush1.bf16.msra.mxu0 0
      %1695 = vmatprep.subr.bf16.mxu0 0
      %1696 = vmatpush1.bf16.msra.mxu0 0
      %1697 = vmatprep.subr.bf16.mxu0 0
      %1698 = vmatpush1.bf16.msra.mxu0 0
      %1699 = vmatprep.subr.bf16.mxu0 0
      %1700 = vmatpush1.bf16.msra.mxu0 0
      %1701 = vmatprep.subr.bf16.mxu0 0
      %1702 = vmatpush1.bf16.msra.mxu0 0
      %1703 = vmatprep.mubr.bf16.mxu0 0
      %1704 = vmatmul.mubr.bf16.gmra.mrb[0].mxu0 %v1636
      %v1705 = vpop.f32.mrb[0].mxu0
      %v1706 = vadd.f32 0.0, %v1705
      %v1707 = vpop.f32.mrb[0].mxu0
      %v1708 = vpop.f32.mrb[0].mxu0
      %v1709 = vadd.f32 0.0, %v1708
      %v1710 = vpop.f32.mrb[0].mxu0
      %1711 = vmatprep.mubr.bf16.mxu0 0
      %1712 = vmatmul.mubr.bf16.gmra.mrb[0].mxu0 %v1639
      %v1713 = vpop.f32.mrb[0].mxu0
      %v1714 = vpop.f32.mrb[0].mxu0
      %v1715 = vpop.f32.mrb[0].mxu0
      %v1716 = vadd.f32 0.0, %v1715
      %v1717 = vpop.f32.mrb[0].mxu0
      %1718 = vmatprep.mubr.bf16.mxu0 0
      %1719 = vmatmul.mubr.bf16.gmra.mrb[0].mxu0 %v1642
      %v1720 = vpop.f32.mrb[0].mxu0
      %v1721 = vadd.f32 0.0, %v1720
      %v1722 = vpop.f32.mrb[0].mxu0
      %v1723 = vpop.f32.mrb[0].mxu0
      %v1724 = vpop.f32.mrb[0].mxu0
      %1725 = vmatprep.mubr.bf16.mxu0 0
      %1726 = vmatmul.mubr.bf16.gmra.mrb[0].mxu0 %v1645
      %v1727 = vpop.f32.mrb[0].mxu0
      %v1728 = vadd.f32 0.0, %v1727
      %v1729 = vpop.f32.mrb[0].mxu0
      %v1730 = vpop.f32.mrb[0].mxu0
      %v1731 = vadd.f32 0.0, %v1730
      %v1732 = vpop.f32.mrb[0].mxu0
      %1733 = vmatprep.mubr.bf16.mxu0 0
      %1734 = vmatmul.mubr.bf16.gmra.mrb[0].mxu0 %v1648
      %v1735 = vpop.f32.mrb[0].mxu0
      %v1736 = vpop.f32.mrb[0].mxu0
      %v1737 = vpop.f32.mrb[0].mxu0
      %v1738 = vadd.f32 0.0, %v1737
      %v1739 = vpop.f32.mrb[0].mxu0
      %1740 = vmatprep.mubr.bf16.mxu0 0
      %1741 = vmatmul.mubr.bf16.gmra.mrb[0].mxu0 %v1651
      %v1742 = vpop.f32.mrb[0].mxu0
      %v1743 = vadd.f32 0.0, %v1742
      %v1744 = vpop.f32.mrb[0].mxu0
      %v1745 = vpop.f32.mrb[0].mxu0
      %v1746 = vpop.f32.mrb[0].mxu0
      %1747 = vmatprep.mubr.bf16.mxu0 0
      %1748 = vmatmul.mubr.bf16.gmra.mrb[0].mxu0 %v1654
      %v1749 = vpop.f32.mrb[0].mxu0
      %v1750 = vadd.f32 0.0, %v1749
      %v1751 = vpop.f32.mrb[0].mxu0
      %v1752 = vpop.f32.mrb[0].mxu0
      %v1753 = vadd.f32 0.0, %v1752
      %v1754 = vpop.f32.mrb[0].mxu0
      %1755 = vmatprep.mubr.bf16.mxu0 0
      %1756 = vmatmul.mubr.bf16.gmra.mrb[0].mxu0 %v1657
      %v1757 = vpop.f32.mrb[0].mxu0
      %v1758 = vpop.f32.mrb[0].mxu0
      %v1759 = vpop.f32.mrb[0].mxu0
      %v1760 = vadd.f32 0.0, %v1759
      %v1761 = vpop.f32.mrb[0].mxu0
      %1762 = vmatprep.mubr.bf16.mxu0 0
      %1763 = vmatmul.mubr.bf16.gmra.mrb[0].mxu0 %v1660
      %v1764 = vpop.f32.mrb[0].mxu0
      %v1765 = vadd.f32 0.0, %v1764
      %v1766 = vpop.f32.mrb[0].mxu0
      %v1767 = vpop.f32.mrb[0].mxu0
      %v1768 = vpop.f32.mrb[0].mxu0
      %1769 = vmatprep.mubr.bf16.mxu0 0
      %1770 = vmatmul.mubr.bf16.gmra.mrb[0].mxu0 %v1663
      %v1771 = vpop.f32.mrb[0].mxu0
      %v1772 = vadd.f32 0.0, %v1771
      %v1773 = vpop.f32.mrb[0].mxu0
      %v1774 = vpop.f32.mrb[0].mxu0
      %v1775 = vadd.f32 0.0, %v1774
      %v1776 = vpop.f32.mrb[0].mxu0
      %1777 = vmatprep.mubr.bf16.mxu0 0
      %1778 = vmatmul.mubr.bf16.gmra.mrb[0].mxu0 %v1666
      %v1779 = vpop.f32.mrb[0].mxu0
      %v1780 = vpop.f32.mrb[0].mxu0
      %v1781 = vpop.f32.mrb[0].mxu0
      %v1782 = vadd.f32 0.0, %v1781
      %v1783 = vpop.f32.mrb[0].mxu0
      %1784 = vmatprep.mubr.bf16.mxu0 0
      %1785 = vmatmul.mubr.bf16.gmra.mrb[0].mxu0 %v1669
      %v1786 = vpop.f32.mrb[0].mxu0
      %v1787 = vadd.f32 0.0, %v1786
      %v1788 = vpop.f32.mrb[0].mxu0
      %v1789 = vpop.f32.mrb[0].mxu0
      %v1790 = vpop.f32.mrb[0].mxu0
      %1791 = vdwg.mxu0
      %v1792 = vadd.f32 %v1535, %v1706
      %v1793 = vadd.f32 %v1536, %v1709
      %v1794 = vadd.f32 %v1537, %v1716
      %v1795 = vadd.f32 %v1538, %v1721
      %v1796 = vadd.f32 %v1539, %v1728
      %v1797 = vadd.f32 %v1540, %v1731
      %v1798 = vadd.f32 %v1541, %v1738
      %v1799 = vadd.f32 %v1542, %v1743
      %v1800 = vadd.f32 %v1543, %v1750
      %v1801 = vadd.f32 %v1544, %v1753
      %v1802 = vadd.f32 %v1545, %v1760
      %v1803 = vadd.f32 %v1546, %v1765
      %v1804 = vadd.f32 %v1547, %v1772
      %v1805 = vadd.f32 %v1548, %v1775
      %v1806 = vadd.f32 %v1549, %v1782
      %v1807 = vadd.f32 %v1550, %v1787
      %v1808 = vld [vmem:[%s226 + $0x78] sm:$0xf]
      %v1809 = vld [vmem:[%s226 + $0x7c] sm:$0xf]
      %v1810 = vld [vmem:[%s226 + $0x80] sm:$0xf]
      %v1811 = vld [vmem:[%s226 + $0x84] sm:$0xf]
      %v1812 = vld [vmem:[%s226 + $0x88] sm:$0xf]
      %v1813 = vld [vmem:[%s226 + $0x8c] sm:$0xf]
      %v1814 = vld [vmem:[%s226 + $0x90] sm:$0xf]
      %v1815 = vld [vmem:[%s226 + $0x94] sm:$0xf]
      %v1816 = vld [vmem:[%s226 + $0x98] sm:$0xf]
      %v1817 = vld [vmem:[%s226 + $0x9c] sm:$0xf]
      %v1818 = vld [vmem:[%s226 + $0xa0] sm:$0xf]
      %v1819 = vld [vmem:[%s226 + $0xa4] sm:$0xf]
      %v1820 = vld [vmem:[%s226 + $0xa8] sm:$0xf]
      %v1821 = vld [vmem:[%s226 + $0xac] sm:$0xf]
      %v1822 = vld [vmem:[%s226 + $0xb0] sm:$0xf]
      %v1823 = vld [vmem:[%s226 + $0xb4] sm:$0xf]
      %v1824 = vld [vmem:[%s226 + $0xb8] sm:$0xf]
      %v1825 = vld [vmem:[%s226 + $0xbc] sm:$0xf]
      %v1826 = vld [vmem:[%s226 + $0xc0] sm:$0xf]
      %v1827 = vld [vmem:[%s226 + $0xc4] sm:$0xf]
      %v1828 = vld [vmem:[%s226 + $0xc8] sm:$0xf]
      %v1829 = vld [vmem:[%s226 + $0xcc] sm:$0xf]
      %v1830 = vld [vmem:[%s226 + $0xd0] sm:$0xf]
      %v1831 = vld [vmem:[%s226 + $0xd4] sm:$0xf]
      %v1856 = vunpack.c.l.b16 %v1808
      %v1857 = vunpack.c.l.b16 %v1809
      %v1858 = vunpack.c.l.b16 %v1810
      %v1859 = vunpack.c.l.b16 %v1811
      %v1860 = vunpack.c.l.b16 %v1812
      %v1861 = vunpack.c.l.b16 %v1813
      %v1862 = vunpack.c.l.b16 %v1814
      %v1863 = vunpack.c.l.b16 %v1815
      %v1864 = vunpack.c.l.b16 %v1816
      %v1865 = vunpack.c.l.b16 %v1817
      %v1866 = vunpack.c.l.b16 %v1818
      %v1867 = vunpack.c.l.b16 %v1819
      %v1868 = vunpack.c.l.b16 %v1820
      %v1869 = vunpack.c.l.b16 %v1821
      %v1870 = vunpack.c.l.b16 %v1822
      %v1871 = vunpack.c.l.b16 %v1823
      %v1872 = vunpack.c.l.b16 %v1824
      %v1873 = vunpack.c.l.b16 %v1825
      %v1874 = vunpack.c.l.b16 %v1826
      %v1875 = vunpack.c.l.b16 %v1827
      %v1876 = vunpack.c.l.b16 %v1828
      %v1877 = vunpack.c.l.b16 %v1829
      %v1878 = vunpack.c.l.b16 %v1830
      %v1879 = vunpack.c.l.b16 %v1831
      %v1880 = vpack.c.b16 %v1857, %v1856
      %v1881 = vpack.c.b16 %v1859, %v1858
      %v1882 = vpack.c.b16 %v1861, %v1860
      %v1883 = vpack.c.b16 %v1863, %v1862
      %v1884 = vpack.c.b16 %v1865, %v1864
      %v1885 = vpack.c.b16 %v1867, %v1866
      %v1886 = vpack.c.b16 %v1869, %v1868
      %v1887 = vpack.c.b16 %v1871, %v1870
      %v1888 = vpack.c.b16 %v1873, %v1872
      %v1889 = vpack.c.b16 %v1875, %v1874
      %v1890 = vpack.c.b16 %v1877, %v1876
      %v1891 = vpack.c.b16 %v1879, %v1878
      %v1893 = vsel %vm405, %v1880, 0
      %v1896 = vsel %vm405, %v1881, 0
      %v1899 = vsel %vm405, %v1882, 0
      %v1902 = vsel %vm405, %v1883, 0
      %v1905 = vsel %vm405, %v1884, 0
      %v1908 = vsel %vm405, %v1885, 0
      %v1911 = vsel %vm405, %v1886, 0
      %v1914 = vsel %vm405, %v1887, 0
      %v1917 = vsel %vm405, %v1888, 0
      %v1920 = vsel %vm405, %v1889, 0
      %v1923 = vsel %vm405, %v1890, 0
      %v1926 = vsel %vm405, %v1891, 0
      %1928 = vmatprep.subr.bf16.mxu0 0
      %1929 = vmatpush1.bf16.msra.mxu0 %v980
      %1930 = vmatprep.subr.bf16.mxu0 0
      %1931 = vmatpush1.bf16.msra.mxu0 %v981
      %1932 = vmatprep.subr.bf16.mxu0 0
      %1933 = vmatpush1.bf16.msra.mxu0 %v982
      %1934 = vmatprep.subr.bf16.mxu0 0
      %1935 = vmatpush1.bf16.msra.mxu0 %v983
      %1936 = vmatprep.subr.bf16.mxu0 0
      %1937 = vmatpush1.bf16.msra.mxu0 %v984
      %1938 = vmatprep.subr.bf16.mxu0 0
      %1939 = vmatpush1.bf16.msra.mxu0 %v985
      %1940 = vmatprep.subr.bf16.mxu0 0
      %1941 = vmatpush1.bf16.msra.mxu0 0
      %1942 = vmatprep.subr.bf16.mxu0 0
      %1943 = vmatpush1.bf16.msra.mxu0 0
      %1944 = vmatprep.subr.bf16.mxu0 0
      %1945 = vmatpush1.bf16.msra.mxu0 0
      %1946 = vmatprep.subr.bf16.mxu0 0
      %1947 = vmatpush1.bf16.msra.mxu0 0
      %1948 = vmatprep.subr.bf16.mxu0 0
      %1949 = vmatpush1.bf16.msra.mxu0 0
      %1950 = vmatprep.subr.bf16.mxu0 0
      %1951 = vmatpush1.bf16.msra.mxu0 0
      %1952 = vmatprep.subr.bf16.mxu0 0
      %1953 = vmatpush1.bf16.msra.mxu0 0
      %1954 = vmatprep.subr.bf16.mxu0 0
      %1955 = vmatpush1.bf16.msra.mxu0 0
      %1956 = vmatprep.subr.bf16.mxu0 0
      %1957 = vmatpush1.bf16.msra.mxu0 0
      %1958 = vmatprep.subr.bf16.mxu0 0
      %1959 = vmatpush1.bf16.msra.mxu0 0
      %1960 = vmatprep.mubr.bf16.mxu0 0
      %1961 = vmatmul.mubr.bf16.gmra.mrb[0].mxu0 %v1893
      %v1962 = vpop.f32.mrb[0].mxu0
      %v1963 = vadd.f32 0.0, %v1962
      %v1964 = vpop.f32.mrb[0].mxu0
      %v1965 = vpop.f32.mrb[0].mxu0
      %v1966 = vadd.f32 0.0, %v1965
      %v1967 = vpop.f32.mrb[0].mxu0
      %1968 = vmatprep.mubr.bf16.mxu0 0
      %1969 = vmatmul.mubr.bf16.gmra.mrb[0].mxu0 %v1896
      %v1970 = vpop.f32.mrb[0].mxu0
      %v1971 = vpop.f32.mrb[0].mxu0
      %v1972 = vpop.f32.mrb[0].mxu0
      %v1973 = vadd.f32 0.0, %v1972
      %v1974 = vpop.f32.mrb[0].mxu0
      %1975 = vmatprep.mubr.bf16.mxu0 0
      %1976 = vmatmul.mubr.bf16.gmra.mrb[0].mxu0 %v1899
      %v1977 = vpop.f32.mrb[0].mxu0
      %v1978 = vadd.f32 0.0, %v1977
      %v1979 = vpop.f32.mrb[0].mxu0
      %v1980 = vpop.f32.mrb[0].mxu0
      %v1981 = vpop.f32.mrb[0].mxu0
      %1982 = vmatprep.mubr.bf16.mxu0 0
      %1983 = vmatmul.mubr.bf16.gmra.mrb[0].mxu0 %v1902
      %v1984 = vpop.f32.mrb[0].mxu0
      %v1985 = vadd.f32 0.0, %v1984
      %v1986 = vpop.f32.mrb[0].mxu0
      %v1987 = vpop.f32.mrb[0].mxu0
      %v1988 = vadd.f32 0.0, %v1987
      %v1989 = vpop.f32.mrb[0].mxu0
      %1990 = vmatprep.mubr.bf16.mxu0 0
      %1991 = vmatmul.mubr.bf16.gmra.mrb[0].mxu0 %v1905
      %v1992 = vpop.f32.mrb[0].mxu0
      %v1993 = vpop.f32.mrb[0].mxu0
      %v1994 = vpop.f32.mrb[0].mxu0
      %v1995 = vadd.f32 0.0, %v1994
      %v1996 = vpop.f32.mrb[0].mxu0
      %1997 = vmatprep.mubr.bf16.mxu0 0
      %1998 = vmatmul.mubr.bf16.gmra.mrb[0].mxu0 %v1908
      %v1999 = vpop.f32.mrb[0].mxu0
      %v2000 = vadd.f32 0.0, %v1999
      %v2001 = vpop.f32.mrb[0].mxu0
      %v2002 = vpop.f32.mrb[0].mxu0
      %v2003 = vpop.f32.mrb[0].mxu0
      %2004 = vmatprep.mubr.bf16.mxu0 0
      %2005 = vmatmul.mubr.bf16.gmra.mrb[0].mxu0 %v1911
      %v2006 = vpop.f32.mrb[0].mxu0
      %v2007 = vadd.f32 0.0, %v2006
      %v2008 = vpop.f32.mrb[0].mxu0
      %v2009 = vpop.f32.mrb[0].mxu0
      %v2010 = vadd.f32 0.0, %v2009
      %v2011 = vpop.f32.mrb[0].mxu0
      %2012 = vmatprep.mubr.bf16.mxu0 0
      %2013 = vmatmul.mubr.bf16.gmra.mrb[0].mxu0 %v1914
      %v2014 = vpop.f32.mrb[0].mxu0
      %v2015 = vpop.f32.mrb[0].mxu0
      %v2016 = vpop.f32.mrb[0].mxu0
      %v2017 = vadd.f32 0.0, %v2016
      %v2018 = vpop.f32.mrb[0].mxu0
      %2019 = vmatprep.mubr.bf16.mxu0 0
      %2020 = vmatmul.mubr.bf16.gmra.mrb[0].mxu0 %v1917
      %v2021 = vpop.f32.mrb[0].mxu0
      %v2022 = vadd.f32 0.0, %v2021
      %v2023 = vpop.f32.mrb[0].mxu0
      %v2024 = vpop.f32.mrb[0].mxu0
      %v2025 = vpop.f32.mrb[0].mxu0
      %2026 = vmatprep.mubr.bf16.mxu0 0
      %2027 = vmatmul.mubr.bf16.gmra.mrb[0].mxu0 %v1920
      %v2028 = vpop.f32.mrb[0].mxu0
      %v2029 = vadd.f32 0.0, %v2028
      %v2030 = vpop.f32.mrb[0].mxu0
      %v2031 = vpop.f32.mrb[0].mxu0
      %v2032 = vadd.f32 0.0, %v2031
      %v2033 = vpop.f32.mrb[0].mxu0
      %2034 = vmatprep.mubr.bf16.mxu0 0
      %2035 = vmatmul.mubr.bf16.gmra.mrb[0].mxu0 %v1923
      %v2036 = vpop.f32.mrb[0].mxu0
      %v2037 = vpop.f32.mrb[0].mxu0
      %v2038 = vpop.f32.mrb[0].mxu0
      %v2039 = vadd.f32 0.0, %v2038
      %v2040 = vpop.f32.mrb[0].mxu0
      %2041 = vmatprep.mubr.bf16.mxu0 0
      %2042 = vmatmul.mubr.bf16.gmra.mrb[0].mxu0 %v1926
      %v2043 = vpop.f32.mrb[0].mxu0
      %v2044 = vadd.f32 0.0, %v2043
      %v2045 = vpop.f32.mrb[0].mxu0
      %v2046 = vpop.f32.mrb[0].mxu0
      %v2047 = vpop.f32.mrb[0].mxu0
      %2048 = vdwg.mxu0
      %v2049 = vadd.f32 %v1792, %v1963
      %v2050 = vadd.f32 %v1793, %v1966
      %v2051 = vadd.f32 %v1794, %v1973
      %v2052 = vadd.f32 %v1795, %v1978
      %v2053 = vadd.f32 %v1796, %v1985
      %v2054 = vadd.f32 %v1797, %v1988
      %v2055 = vadd.f32 %v1798, %v1995
      %v2056 = vadd.f32 %v1799, %v2000
      %v2057 = vadd.f32 %v1800, %v2007
      %v2058 = vadd.f32 %v1801, %v2010
      %v2059 = vadd.f32 %v1802, %v2017
      %v2060 = vadd.f32 %v1803, %v2022
      %v2061 = vadd.f32 %v1804, %v2029
      %v2062 = vadd.f32 %v1805, %v2032
      %v2063 = vadd.f32 %v1806, %v2039
      %v2064 = vadd.f32 %v1807, %v2044
      %vm2065 = vcmp.ge.f32.partialorder %v2049, 0.0
      %vm2066 = vcmp.ge.f32.partialorder %v2050, 0.0
      %vm2067 = vcmp.ge.f32.partialorder %v2051, 0.0
      %vm2068 = vcmp.ge.f32.partialorder %v2052, 0.0
      %vm2069 = vcmp.ge.f32.partialorder %v2053, 0.0
      %vm2070 = vcmp.ge.f32.partialorder %v2054, 0.0
      %vm2071 = vcmp.ge.f32.partialorder %v2055, 0.0
      %vm2072 = vcmp.ge.f32.partialorder %v2056, 0.0
      %vm2073 = vcmp.ge.f32.partialorder %v2057, 0.0
      %vm2074 = vcmp.ge.f32.partialorder %v2058, 0.0
      %vm2075 = vcmp.ge.f32.partialorder %v2059, 0.0
      %vm2076 = vcmp.ge.f32.partialorder %v2060, 0.0
      %vm2077 = vcmp.ge.f32.partialorder %v2061, 0.0
      %vm2078 = vcmp.ge.f32.partialorder %v2062, 0.0
      %vm2079 = vcmp.ge.f32.partialorder %v2063, 0.0
      %vm2080 = vcmp.ge.f32.partialorder %v2064, 0.0
      %v2081 = vmul.f32 %v1181, %v2049
      %v2082 = vmul.f32 %v1181, %v2050
      %v2083 = vmul.f32 %v1181, %v2051
      %v2084 = vmul.f32 %v1181, %v2052
      %v2085 = vmul.f32 %v1181, %v2053
      %v2086 = vmul.f32 %v1181, %v2054
      %v2087 = vmul.f32 %v1181, %v2055
      %v2088 = vmul.f32 %v1181, %v2056
      %v2089 = vmul.f32 %v1181, %v2057
      %v2090 = vmul.f32 %v1181, %v2058
      %v2091 = vmul.f32 %v1181, %v2059
      %v2092 = vmul.f32 %v1181, %v2060
      %v2093 = vmul.f32 %v1181, %v2061
      %v2094 = vmul.f32 %v1181, %v2062
      %v2095 = vmul.f32 %v1181, %v2063
      %v2096 = vmul.f32 %v1181, %v2064
      %v2097 = vsel %vm2065, %v2049, %v2081
      %v2098 = vsel %vm2066, %v2050, %v2082
      %v2099 = vsel %vm2067, %v2051, %v2083
      %v2100 = vsel %vm2068, %v2052, %v2084
      %v2101 = vsel %vm2069, %v2053, %v2085
      %v2102 = vsel %vm2070, %v2054, %v2086
      %v2103 = vsel %vm2071, %v2055, %v2087
      %v2104 = vsel %vm2072, %v2056, %v2088
      %v2105 = vsel %vm2073, %v2057, %v2089
      %v2106 = vsel %vm2074, %v2058, %v2090
      %v2107 = vsel %vm2075, %v2059, %v2091
      %v2108 = vsel %vm2076, %v2060, %v2092
      %v2109 = vsel %vm2077, %v2061, %v2093
      %v2110 = vsel %vm2078, %v2062, %v2094
      %v2111 = vsel %vm2079, %v2063, %v2095
      %v2112 = vsel %vm2080, %v2064, %v2096
      %v2113 = vpack.c.bf16 %v2098, %v2097
      %v2114 = vpack.c.bf16 %v2100, %v2099
      %v2115 = vpack.c.bf16 %v2102, %v2101
      %v2116 = vpack.c.bf16 %v2104, %v2103
      %v2117 = vpack.c.bf16 %v2106, %v2105
      %v2118 = vpack.c.bf16 %v2108, %v2107
      %v2119 = vpack.c.bf16 %v2110, %v2109
      %v2120 = vpack.c.bf16 %v2112, %v2111
      %v2129 = vunpack.c.l.b16 %v2113
      %v2130 = vunpack.c.h.b16 %v2113
      %v2131 = vunpack.c.l.b16 %v2114
      %v2132 = vunpack.c.h.b16 %v2114
      %v2133 = vunpack.c.l.b16 %v2115
      %v2134 = vunpack.c.h.b16 %v2115
      %v2135 = vunpack.c.l.b16 %v2116
      %v2136 = vunpack.c.h.b16 %v2116
      %v2137 = vunpack.c.l.b16 %v2117
      %v2138 = vunpack.c.h.b16 %v2117
      %v2139 = vunpack.c.l.b16 %v2118
      %v2140 = vunpack.c.h.b16 %v2118
      %v2141 = vunpack.c.l.b16 %v2119
      %v2142 = vunpack.c.h.b16 %v2119
      %v2143 = vunpack.c.l.b16 %v2120
      %v2144 = vunpack.c.h.b16 %v2120
      %v2145 = vpack.c.b16 %v2129, %v2129
      %v2146 = vpack.c.b16 %v2130, %v2130
      %v2147 = vpack.c.b16 %v2131, %v2131
      %v2148 = vpack.c.b16 %v2132, %v2132
      %v2149 = vpack.c.b16 %v2133, %v2133
      %v2150 = vpack.c.b16 %v2134, %v2134
      %v2151 = vpack.c.b16 %v2135, %v2135
      %v2152 = vpack.c.b16 %v2136, %v2136
      %v2153 = vpack.c.b16 %v2137, %v2137
      %v2154 = vpack.c.b16 %v2138, %v2138
      %v2155 = vpack.c.b16 %v2139, %v2139
      %v2156 = vpack.c.b16 %v2140, %v2140
      %v2157 = vpack.c.b16 %v2141, %v2141
      %v2158 = vpack.c.b16 %v2142, %v2142
      %v2159 = vpack.c.b16 %v2143, %v2143
      %v2160 = vpack.c.b16 %v2144, %v2144
      %s2177 = scalar_lea.vmem %s236, 64
      %2178 = vst [vmem:[%s2177] sm:$0xf] %v2145
      %2179 = vst [vmem:[%s2177 + $0x4] sm:$0xf] %v2146
      %2180 = vst [vmem:[%s2177 + $0x8] sm:$0xf] %v2147
      %2181 = vst [vmem:[%s2177 + $0xc] sm:$0xf] %v2148
      %2182 = vst [vmem:[%s2177 + $0x10] sm:$0xf] %v2149
      %2183 = vst [vmem:[%s2177 + $0x14] sm:$0xf] %v2150
      %2184 = vst [vmem:[%s2177 + $0x18] sm:$0xf] %v2151
      %2185 = vst [vmem:[%s2177 + $0x1c] sm:$0xf] %v2152
      %2186 = vst [vmem:[%s2177 + $0x20] sm:$0xf] %v2153
      %2187 = vst [vmem:[%s2177 + $0x24] sm:$0xf] %v2154
      %2188 = vst [vmem:[%s2177 + $0x28] sm:$0xf] %v2155
      %2189 = vst [vmem:[%s2177 + $0x2c] sm:$0xf] %v2156
      %2190 = vst [vmem:[%s2177 + $0x30] sm:$0xf] %v2157
      %2191 = vst [vmem:[%s2177 + $0x34] sm:$0xf] %v2158
      %2192 = vst [vmem:[%s2177 + $0x38] sm:$0xf] %v2159
      %2193 = vst [vmem:[%s2177 + $0x3c] sm:$0xf] %v2160
      %s2194 = smul.u32 16, %s21
      %p2195 = scmp.lt.s32.totalorder %s20, 1
      %s2196 = scalar_select %p2195, %s20, 1
      %p2197 = scmp.lt.s32.totalorder %s2194, 15
      %s2198 = scalar_select %p2197, %s2194, 15
      %s2199 = smul.addr %s2198, 2
      %s2200 = smul.addr %s2196, 32
      %s2201 = sadd.s32 %s2199, %s2200
      %s2202 = smul.addr %s2201, 4
      %s2203 = scalar_lea.vmem %s4, %s2202
      // Predicated region
      $region37: #{upsample_block_forward.1} parent=35 // pred_check
        %p2204 = pneg %p139
      $region38: #{upsample_block_forward.1} parent=35 // pred_check_branch
        %2206 = sbr.rel (%p2204) target = $region40
      $region39: #{upsample_block_forward.1} parent=35 // pred_region
        %s2207 = smul.u32 16, %s21
      $region40: #{upsample_block_forward.1} parent=35 // pred_fallthru
        _
    $region36: #{upsample_block_forward.1} parent=5 // pred_fallthru
      _
    %p2208 = scmp.le.s32.totalorder 2, %s11
    // Predicated region
    $region41: #{upsample_block_forward.1} parent=5 // pred_check
      %p2209 = pneg %p2208
    $region42: #{upsample_block_forward.1} parent=5 // pred_check_branch
      %2211 = sbr.rel (%p2209) target = $region44
    $region43: #{upsample_block_forward.1} parent=5 // pred_region
      %s2212 = ssub.s32 %s11, 2
      // Predicated region
      $region45: #{upsample_block_forward.1} parent=43 // pred_check
        %p2213 = pneg %p145
      $region46: #{upsample_block_forward.1} parent=43 // pred_check_branch
        %2215 = sbr.rel (%p2213) target = $region48
      $region47: #{upsample_block_forward.1} parent=43 // pred_region
        %s2216 = smul.u32 16, %s23
        %p2217 = scmp.lt.s32.totalorder %s22, 1
        %s2218 = scalar_select %p2217, %s22, 1
        %p2219 = scmp.lt.s32.totalorder %s2216, 15
        %s2220 = scalar_select %p2219, %s2216, 15
        %s2221 = smul.addr %s2220, 2
        %s2222 = smul.addr %s2218, 32
        %s2223 = sadd.s32 %s2221, %s2222
        %s2224 = smul.addr %s2223, 4
        %s2225 = scalar_lea.vmem %s4, %s2224
      $region48: #{upsample_block_forward.1} parent=43 // pred_fallthru
        _
    $region44: #{upsample_block_forward.1} parent=5 // pred_fallthru
      _
  $region6: #{upsample_block_forward.1} parent=0 // loop_footer
    %s15 = sadd.s32 1, %s11
  $region7: #{upsample_block_forward.1} parent=0 // loop_footer_branch
    %10 = sbr.rel target = $region3
  $region8: #{upsample_block_forward.1} parent=0 // loop_exit
    _

</llo_original>
